<compile_context>
chip_gen: v6e
topology: v6e:2x2x1
jax: 0.10.0
libtpu: 0.0.40
codegen_flags: <defaults>
</compile_context>

<pallas_src>
import functools

import jax
import jax.numpy as jnp
from jax.experimental import pallas as pl
from jax.experimental.pallas import tpu as pltpu


# ----------------------------- kernel helpers ------------------------------

def _gelu_exact(x):
    # PyTorch nn.GELU() default is the exact erf form.
    return 0.5 * x * (1.0 + jax.lax.erf(x * 0.7071067811865476))


def _layernorm(x, g, b, eps=1e-5):
    mu = jnp.mean(x, axis=-1, keepdims=True)
    var = jnp.mean(jnp.square(x - mu), axis=-1, keepdims=True)
    return (x - mu) * jax.lax.rsqrt(var + eps) * g + b


# ------------------------------- the kernel --------------------------------

def mixer_kernel(depth, bt, num_patch,
                 patches_ref, we_ref, vdim_ref, tb1f_ref, tb2f_ref, cb1_ref,
                 tw1t_ref, tw2t_ref, cw1_ref, cw2_ref, avg_ref,
                 out_ref, tmix_ref):
    """One grid step processes `bt` whole images (bt*num_patch token rows)."""
    N = num_patch
    bf16 = jnp.bfloat16

    be = vdim_ref[0:1, :]
    lnfg = vdim_ref[1:2, :]
    lnfb = vdim_ref[2:3, :]

    # Patch embedding: (bt*N, Cpp)bf16 @ (Cpp, dim)bf16 -> f32 + bias
    x = jnp.dot(patches_ref[0], we_ref[...],
                preferred_element_type=jnp.float32) + be

    # TODO(synk): at production Mixer sizes (dim=768, depth=12, N=196, ...)
    # move `depth` onto an "arbitrary" grid axis (or pltpu.emit_pipeline),
    # keep the residual x in VMEM scratch across it and stream only the
    # current layer's bf16 weights (v7x has 64 MiB VMEM); also single-buffer
    # the grid-invariant constant operands (pipeline_mode=pl.Buffered(1)).
    # Unnecessary at this toy size where everything fits comfortably.
    for l in range(depth):
        ln1g = vdim_ref[3 + l: 4 + l, :]
        ln1b = vdim_ref[3 + depth + l: 4 + depth + l, :]
        ln2g = vdim_ref[3 + 2 * depth + l: 4 + 2 * depth + l, :]
        ln2b = vdim_ref[3 + 3 * depth + l: 4 + 3 * depth + l, :]
        cb2 = vdim_ref[3 + 4 * depth + l: 4 + 4 * depth + l, :]
        cb1 = cb1_ref[l: l + 1, :]          # (1, channel_dim) f32
        tb1 = tb1f_ref[l]                   # (T, dim) f32, pre-broadcast
        tb2 = tb2f_ref[l]                   # (N, dim) f32, pre-broadcast
        tw1t = tw1t_ref[l]                  # (T, N) bf16
        tw2t = tw2t_ref[l]                  # (N, T) bf16
        cw1 = cw1_ref[l]                    # (dim, channel_dim) bf16
        cw2 = cw2_ref[l]                    # (channel_dim, dim) bf16

        # ---- token mixing: per image; transposes folded into operand order
        #      so `dim` stays on the lane axis; per-image results land in a
        #      VMEM scratch slab (no concatenate). ----
        y = _layernorm(x, ln1g, ln1b)                      # (bt*N, dim) f32
        for b in range(bt):
            yb = y[b * N:(b + 1) * N, :].astype(bf16)      # (N, dim)
            hb = _gelu_exact(
                jnp.dot(tw1t, yb, preferred_element_type=jnp.float32) + tb1)
            tb = jnp.dot(tw2t, hb.astype(bf16),
                         preferred_element_type=jnp.float32) + tb2
            tmix_ref[b * N:(b + 1) * N, :] = tb            # (N, dim) f32
        x = x + tmix_ref[...]                              # residual, no .T

        # ---- channel mixing: row-wise, safe on the flattened batch ----
        z = _layernorm(x, ln2g, ln2b)
        h2 = _gelu_exact(
            jnp.dot(z.astype(bf16), cw1,
                    preferred_element_type=jnp.float32) + cb1)
        x = x + (jnp.dot(h2.astype(bf16), cw2,
                         preferred_element_type=jnp.float32) + cb2)

    # ---- final LayerNorm + per-image mean over patches via the precomputed
    #      host-side block-averaging matrix (single lane-dense store). ----
    xn = _layernorm(x, lnfg, lnfb)
    out_ref[0] = jnp.dot(avg_ref[...], xn, preferred_element_type=jnp.float32)

    # NOTE: nn.Dropout(p=0.0) is the identity (inference semantics) -> omitted.


# ------------------------------ host wrapper --------------------------------

def _default_num_blocks(batch):
    """1 kernel step on v5e/v6e (1 TensorCore); 2 parallel steps on v7x."""
    try:
        kind = jax.devices()[0].device_kind.lower()
    except Exception:
        kind = ""
    if batch % 2 == 0 and ("v7" in kind or "7x" in kind or "tpu7" in kind):
        return 2
    return 1


def mlp_mixer_forward(x, params, patch_size, depth, num_blocks=None):
    B, C, H, W = x.shape
    p = patch_size
    Hp, Wp = H // p, W // p
    N = Hp * Wp
    Cpp = C * p * p
    dim = params["embed_w"].shape[0]
    token_dim = params["tw1"].shape[-1]
    channel_dim = params["cw1"].shape[-1]
    bf16 = jnp.bfloat16

    if num_blocks is None:
        num_blocks = _default_num_blocks(B)
    assert B % num_blocks == 0
    bt = B // num_blocks

    # Glue: patch extraction, (c, ph, pw) flatten order matches OIHW conv weight.
    # Kept bf16 so the only per-step streamed operand DMAs half the bytes.
    xp = (x.reshape(B, C, Hp, p, Wp, p)
            .transpose(0, 2, 4, 1, 3, 5)
            .reshape(num_blocks, bt * N, Cpp)).astype(bf16)
    We = params["embed_w"].reshape(dim, Cpp).T.astype(bf16)   # (Cpp, dim)

    # Pack every `dim`-wide f32 vector into a single lane-dense operand.
    vdim = jnp.concatenate([
        params["embed_b"].reshape(1, dim),
        params["lnfg"].reshape(1, dim),
        params["lnfb"].reshape(1, dim),
        params["ln1g"].reshape(depth, dim),
        params["ln1b"].reshape(depth, dim),
        params["ln2g"].reshape(depth, dim),
        params["ln2b"].reshape(depth, dim),
        params["cb2"].reshape(depth, dim),
    ], axis=0).astype(jnp.float32)                            # (3 + 5*depth, dim)

    # Token-MLP biases pre-broadcast to lane-dense (T, dim)/(N, dim) tiles.
    tb1f = jnp.broadcast_to(params["tb1"].reshape(depth, token_dim, 1),
                            (depth, token_dim, dim)).astype(jnp.float32)
    tb2f = jnp.broadcast_to(params["tb2"].reshape(depth, N, 1),
                            (depth, N, dim)).astype(jnp.float32)

    cb1 = params["cb1"].reshape(depth, channel_dim).astype(jnp.float32)
    tw1t = jnp.swapaxes(params["tw1"], 1, 2).astype(bf16)     # (depth, T, N)
    tw2t = jnp.swapaxes(params["tw2"], 1, 2).astype(bf16)     # (depth, N, T)
    cw1 = params["cw1"].astype(bf16)                          # (depth, dim, ch)
    cw2 = params["cw2"].astype(bf16)                          # (depth, ch, dim)

    # Precomputed block-diagonal averaging matrix: (bt, bt*N), row b has 1/N
    # in columns [b*N, (b+1)*N).
    avg = (jnp.repeat(jnp.eye(bt, dtype=jnp.float32), N, axis=1) / float(N))

    consts = (We, vdim, tb1f, tb2f, cb1, tw1t, tw2t, cw1, cw2, avg)

    def _const_spec(a):
        zeros = (0,) * a.ndim
        return pl.BlockSpec(a.shape, lambda g, _z=zeros: _z)

    in_specs = [pl.BlockSpec((1, bt * N, Cpp), lambda g: (g, 0, 0))]
    in_specs += [_const_spec(a) for a in consts]

    out = pl.pallas_call(
        functools.partial(mixer_kernel, depth, bt, N),
        out_shape=jax.ShapeDtypeStruct((num_blocks, bt, dim), jnp.float32),
        grid=(num_blocks,),
        in_specs=in_specs,
        out_specs=pl.BlockSpec((1, bt, dim), lambda g: (g, 0, 0)),
        scratch_shapes=[pltpu.VMEM((bt * N, dim), jnp.float32)],
        compiler_params=pltpu.CompilerParams(
            dimension_semantics=("parallel",)),
    )(xp, *consts)
    return out.reshape(B, dim)


# --------------------------- parameter construction -------------------------

def init_params(key, in_channels, dim, patch_size, num_patch, depth,
                token_dim, channel_dim):
    keys = jax.random.split(key, 16)

    def nrm(k, shape, scale=0.1):
        return scale * jax.random.normal(k, shape, dtype=jnp.float32)

    return dict(
        embed_w=nrm(keys[0], (dim, in_channels, patch_size, patch_size)),
        embed_b=nrm(keys[1], (dim,)),
        ln1g=1.0 + nrm(keys[2], (depth, 1, dim)),
        ln1b=nrm(keys[3], (depth, 1, dim)),
        tw1=nrm(keys[4], (depth, num_patch, token_dim)),
        tb1=nrm(keys[5], (depth, 1, token_dim)),
        tw2=nrm(keys[6], (depth, token_dim, num_patch)),
        tb2=nrm(keys[7], (depth, 1, num_patch)),
        ln2g=1.0 + nrm(keys[8], (depth, 1, dim)),
        ln2b=nrm(keys[9], (depth, 1, dim)),
        cw1=nrm(keys[10], (depth, dim, channel_dim)),
        cb1=nrm(keys[11], (depth, 1, channel_dim)),
        cw2=nrm(keys[12], (depth, channel_dim, dim)),
        cb2=nrm(keys[13], (depth, 1, dim)),
        lnfg=1.0 + nrm(keys[14], (1, dim)),
        lnfb=nrm(keys[15], (1, dim)),
    )


# ------------------------------ pure-JAX reference ---------------------------

def reference_forward(x, params, patch_size, depth, mm_dtype=None):
    """Pure-JAX MLPMixer forward.  If mm_dtype is set, matmul/conv operands are
    cast to it (f32 accumulation), emulating the kernel's bf16 MXU path."""
    p = patch_size
    dim = params["embed_w"].shape[0]
    cast = (lambda a: a.astype(mm_dtype)) if mm_dtype is not None else (lambda a: a)

    def mm(a, b):
        return jnp.dot(cast(a), cast(b), preferred_element_type=jnp.float32)

    y = jax.lax.conv_general_dilated(
        cast(x), cast(params["embed_w"]), (p, p), "VALID",
        dimension_numbers=("NCHW", "OIHW", "NCHW"),
        preferred_element_type=jnp.float32)
    y = y + params["embed_b"].reshape(1, dim, 1, 1)
    B, D, Hp, Wp = y.shape
    tok = y.reshape(B, D, Hp * Wp).transpose(0, 2, 1)            # b (h w) c

    def ln(v, g, b):
        mu = jnp.mean(v, axis=-1, keepdims=True)
        var = jnp.mean(jnp.square(v - mu), axis=-1, keepdims=True)
        return (v - mu) * jax.lax.rsqrt(var + 1e-5) * g + b

    def gelu(v):
        return 0.5 * v * (1.0 + jax.lax.erf(v * 0.7071067811865476))

    for l in range(depth):
        yl = ln(tok, params["ln1g"][l], params["ln1b"][l])
        yt = jnp.swapaxes(yl, 1, 2)                              # b d n
        h = gelu(mm(yt, params["tw1"][l]) + params["tb1"][l])
        t = mm(h, params["tw2"][l]) + params["tb2"][l]
        tok = tok + jnp.swapaxes(t, 1, 2)
        z = ln(tok, params["ln2g"][l], params["ln2b"][l])
        h2 = gelu(mm(z, params["cw1"][l]) + params["cb1"][l])
        tok = tok + mm(h2, params["cw2"][l]) + params["cb2"][l]
    tok = ln(tok, params["lnfg"], params["lnfb"])
    return jnp.mean(tok, axis=1)


# ----------------------------------- main ------------------------------------

if __name__ == "__main__":
    # Module config (small): MLPMixer(in_channels=4, dim=32, num_classes=10,
    #   patch_size=4, image_size=16, depth=2, token_dim=16, channel_dim=64)
    in_channels, dim, patch_size, image_size = 4, 32, 4, 16
    depth, token_dim, channel_dim = 2, 16, 64
    num_patch = (image_size // patch_size) ** 2                  # 16
    B = 2

    key = jax.random.PRNGKey(0)
    kx, kp = jax.random.split(key)
    x = jax.random.normal(kx, (B, in_channels, image_size, image_size),
                          dtype=jnp.float32)
    params = init_params(kp, in_channels, dim, patch_size, num_patch,
                         depth, token_dim, channel_dim)

    out = mlp_mixer_forward(x, params, patch_size, depth)
    out = jax.block_until_ready(out)
    assert out.shape == (B, dim)

    # Tight check vs. a reference that uses the same bf16 matmul operands
    # (f32 accumulation) -> validates the kernel math exactly.
    ref_bf16 = jax.block_until_ready(
        reference_forward(x, params, patch_size, depth, mm_dtype=jnp.bfloat16))
    assert jnp.allclose(out, ref_bf16, rtol=5e-3, atol=5e-3), (
        f"max abs diff vs bf16 reference {jnp.max(jnp.abs(out - ref_bf16))}")

    # Loose sanity check vs. the full-f32 PyTorch-semantics reference
    # (bounds the bf16 weight/activation quantization drift).
    ref_f32 = jax.block_until_ready(
        reference_forward(x, params, patch_size, depth))
    assert jnp.allclose(out, ref_f32, rtol=1e-1, atol=1e-1), (
        f"max abs diff vs f32 reference {jnp.max(jnp.abs(out - ref_f32))}")

    print("KERNEL_OK")
</pallas_src>

<mosaic_0001>
module attributes {stable_mosaic.version = 11 : i64} {
  func.func @mixer_kernel(%arg0: i32, %arg1: memref<1x32x64xbf16, #tpu.memory_space<vmem>>, %arg2: memref<64x32xbf16, #tpu.memory_space<vmem>>, %arg3: memref<13x32xf32, #tpu.memory_space<vmem>>, %arg4: memref<2x16x32xf32, #tpu.memory_space<vmem>>, %arg5: memref<2x16x32xf32, #tpu.memory_space<vmem>>, %arg6: memref<2x64xf32, #tpu.memory_space<vmem>>, %arg7: memref<2x16x16xbf16, #tpu.memory_space<vmem>>, %arg8: memref<2x16x16xbf16, #tpu.memory_space<vmem>>, %arg9: memref<2x32x64xbf16, #tpu.memory_space<vmem>>, %arg10: memref<2x64x32xbf16, #tpu.memory_space<vmem>>, %arg11: memref<2x32xf32, #tpu.memory_space<vmem>>, %arg12: memref<1x2x32xf32, #tpu.memory_space<vmem>>, %arg13: memref<32x32xf32, #tpu.memory_space<vmem>>) attributes {dimension_semantics = [#tpu.dimension_semantics<parallel>], iteration_bounds = array<i64: 1>, scalar_prefetch = 0 : i64, scratch_operands = 1 : i64, tpu.core_type = #tpu.core_type<tc>, window_params = [{transform_indices = @transform_0, window_bounds = array<i64: 1, 32, 64>}, {pipeline_mode = #tpu.pipeline_mode<synchronous>, transform_indices = @transform_1, window_bounds = array<i64: 64, 32>}, {pipeline_mode = #tpu.pipeline_mode<synchronous>, transform_indices = @transform_2, window_bounds = array<i64: 13, 32>}, {pipeline_mode = #tpu.pipeline_mode<synchronous>, transform_indices = @transform_3, window_bounds = array<i64: 2, 16, 32>}, {pipeline_mode = #tpu.pipeline_mode<synchronous>, transform_indices = @transform_4, window_bounds = array<i64: 2, 16, 32>}, {pipeline_mode = #tpu.pipeline_mode<synchronous>, transform_indices = @transform_5, window_bounds = array<i64: 2, 64>}, {pipeline_mode = #tpu.pipeline_mode<synchronous>, transform_indices = @transform_6, window_bounds = array<i64: 2, 16, 16>}, {pipeline_mode = #tpu.pipeline_mode<synchronous>, transform_indices = @transform_7, window_bounds = array<i64: 2, 16, 16>}, {pipeline_mode = #tpu.pipeline_mode<synchronous>, transform_indices = @transform_8, window_bounds = array<i64: 2, 32, 64>}, {pipeline_mode = #tpu.pipeline_mode<synchronous>, transform_indices = @transform_9, window_bounds = array<i64: 2, 64, 32>}, {pipeline_mode = #tpu.pipeline_mode<synchronous>, transform_indices = @transform_10, window_bounds = array<i64: 2, 32>}, {transform_indices = @transform_11, window_bounds = array<i64: 1, 2, 32>}]} {
    %c0 = arith.constant 0 : index
    %c0_0 = arith.constant 0 : index
    %0 = vector.load %arg3[%c0, %c0_0] : memref<13x32xf32, #tpu.memory_space<vmem>>, vector<1x32xf32>
    %c1 = arith.constant 1 : index
    %c0_1 = arith.constant 0 : index
    %1 = vector.load %arg3[%c1, %c0_1] : memref<13x32xf32, #tpu.memory_space<vmem>>, vector<1x32xf32>
    %c2 = arith.constant 2 : index
    %c0_2 = arith.constant 0 : index
    %2 = vector.load %arg3[%c2, %c0_2] : memref<13x32xf32, #tpu.memory_space<vmem>>, vector<1x32xf32>
    %c0_3 = arith.constant 0 : index
    %c0_4 = arith.constant 0 : index
    %c0_5 = arith.constant 0 : index
    %3 = vector.load %arg1[%c0_3, %c0_4, %c0_5] : memref<1x32x64xbf16, #tpu.memory_space<vmem>>, vector<1x32x64xbf16>
    %4 = vector.shape_cast %3 : vector<1x32x64xbf16> to vector<32x64xbf16>
    %c0_6 = arith.constant 0 : index
    %c0_7 = arith.constant 0 : index
    %5 = vector.load %arg2[%c0_6, %c0_7] : memref<64x32xbf16, #tpu.memory_space<vmem>>, vector<64x32xbf16>
    %cst = arith.constant dense<0.000000e+00> : vector<32x32xf32>
    %6 = tpu.matmul %4, %5, %cst {dimension_numbers = #tpu.dot_dimension_numbers<[1], [0], [0], [1], [0, 0, 1, 1], [], []>} : vector<32x64xbf16>, vector<64x32xbf16>, vector<32x32xf32> -> vector<32x32xf32>
    %7 = vector.broadcast %0 : vector<1x32xf32> to vector<32x32xf32>
    %8 = arith.addf %6, %7 : vector<32x32xf32>
    %c3 = arith.constant 3 : index
    %c0_8 = arith.constant 0 : index
    %9 = vector.load %arg3[%c3, %c0_8] : memref<13x32xf32, #tpu.memory_space<vmem>>, vector<1x32xf32>
    %c5 = arith.constant 5 : index
    %c0_9 = arith.constant 0 : index
    %10 = vector.load %arg3[%c5, %c0_9] : memref<13x32xf32, #tpu.memory_space<vmem>>, vector<1x32xf32>
    %c7 = arith.constant 7 : index
    %c0_10 = arith.constant 0 : index
    %11 = vector.load %arg3[%c7, %c0_10] : memref<13x32xf32, #tpu.memory_space<vmem>>, vector<1x32xf32>
    %c9 = arith.constant 9 : index
    %c0_11 = arith.constant 0 : index
    %12 = vector.load %arg3[%c9, %c0_11] : memref<13x32xf32, #tpu.memory_space<vmem>>, vector<1x32xf32>
    %c11 = arith.constant 11 : index
    %c0_12 = arith.constant 0 : index
    %13 = vector.load %arg3[%c11, %c0_12] : memref<13x32xf32, #tpu.memory_space<vmem>>, vector<1x32xf32>
    %c0_13 = arith.constant 0 : index
    %c0_14 = arith.constant 0 : index
    %14 = vector.load %arg6[%c0_13, %c0_14] : memref<2x64xf32, #tpu.memory_space<vmem>>, vector<1x64xf32>
    %c0_15 = arith.constant 0 : index
    %c0_16 = arith.constant 0 : index
    %c0_17 = arith.constant 0 : index
    %15 = vector.load %arg4[%c0_15, %c0_16, %c0_17] : memref<2x16x32xf32, #tpu.memory_space<vmem>>, vector<1x16x32xf32>
    %16 = vector.shape_cast %15 : vector<1x16x32xf32> to vector<16x32xf32>
    %c0_18 = arith.constant 0 : index
    %c0_19 = arith.constant 0 : index
    %c0_20 = arith.constant 0 : index
    %17 = vector.load %arg5[%c0_18, %c0_19, %c0_20] : memref<2x16x32xf32, #tpu.memory_space<vmem>>, vector<1x16x32xf32>
    %18 = vector.shape_cast %17 : vector<1x16x32xf32> to vector<16x32xf32>
    %c0_21 = arith.constant 0 : index
    %c0_22 = arith.constant 0 : index
    %c0_23 = arith.constant 0 : index
    %19 = vector.load %arg7[%c0_21, %c0_22, %c0_23] : memref<2x16x16xbf16, #tpu.memory_space<vmem>>, vector<1x16x16xbf16>
    %20 = vector.shape_cast %19 : vector<1x16x16xbf16> to vector<16x16xbf16>
    %c0_24 = arith.constant 0 : index
    %c0_25 = arith.constant 0 : index
    %c0_26 = arith.constant 0 : index
    %21 = vector.load %arg8[%c0_24, %c0_25, %c0_26] : memref<2x16x16xbf16, #tpu.memory_space<vmem>>, vector<1x16x16xbf16>
    %22 = vector.shape_cast %21 : vector<1x16x16xbf16> to vector<16x16xbf16>
    %c0_27 = arith.constant 0 : index
    %c0_28 = arith.constant 0 : index
    %c0_29 = arith.constant 0 : index
    %23 = vector.load %arg9[%c0_27, %c0_28, %c0_29] : memref<2x32x64xbf16, #tpu.memory_space<vmem>>, vector<1x32x64xbf16>
    %24 = vector.shape_cast %23 : vector<1x32x64xbf16> to vector<32x64xbf16>
    %c0_30 = arith.constant 0 : index
    %c0_31 = arith.constant 0 : index
    %c0_32 = arith.constant 0 : index
    %25 = vector.load %arg10[%c0_30, %c0_31, %c0_32] : memref<2x64x32xbf16, #tpu.memory_space<vmem>>, vector<1x64x32xbf16>
    %26 = vector.shape_cast %25 : vector<1x64x32xbf16> to vector<64x32xbf16>
    %cst_33 = arith.constant dense<0.000000e+00> : vector<32xf32>
    %27 = vector.multi_reduction <add>, %8, %cst_33 [1] : vector<32x32xf32> to vector<32xf32>
    %28 = vector.shape_cast %27 : vector<32xf32> to vector<32x1xf32>
    %cst_34 = arith.constant 3.200000e+01 : f32
    %29 = vector.broadcast %cst_34 : f32 to vector<32x1xf32>
    %30 = arith.divf %28, %29 : vector<32x1xf32>
    %31 = vector.broadcast %30 : vector<32x1xf32> to vector<32x32xf32>
    %32 = arith.subf %8, %31 : vector<32x32xf32>
    %33 = arith.mulf %32, %32 : vector<32x32xf32>
    %cst_35 = arith.constant dense<0.000000e+00> : vector<32xf32>
    %34 = vector.multi_reduction <add>, %33, %cst_35 [1] : vector<32x32xf32> to vector<32xf32>
    %35 = vector.shape_cast %34 : vector<32xf32> to vector<32x1xf32>
    %cst_36 = arith.constant 3.200000e+01 : f32
    %36 = vector.broadcast %cst_36 : f32 to vector<32x1xf32>
    %37 = arith.divf %35, %36 : vector<32x1xf32>
    %38 = vector.broadcast %30 : vector<32x1xf32> to vector<32x32xf32>
    %39 = arith.subf %8, %38 : vector<32x32xf32>
    %cst_37 = arith.constant 9.99999974E-6 : f32
    %40 = vector.broadcast %cst_37 : f32 to vector<32x1xf32>
    %41 = arith.addf %37, %40 : vector<32x1xf32>
    %42 = math.rsqrt %41 : vector<32x1xf32>
    %43 = vector.broadcast %42 : vector<32x1xf32> to vector<32x32xf32>
    %44 = arith.mulf %39, %43 : vector<32x32xf32>
    %45 = vector.broadcast %9 : vector<1x32xf32> to vector<32x32xf32>
    %46 = arith.mulf %44, %45 : vector<32x32xf32>
    %47 = vector.broadcast %10 : vector<1x32xf32> to vector<32x32xf32>
    %48 = arith.addf %46, %47 : vector<32x32xf32>
    %49 = vector.extract_strided_slice %48 {offsets = [0, 0], sizes = [16, 32], strides = [1, 1]} : vector<32x32xf32> to vector<16x32xf32>
    %50 = arith.truncf %49 : vector<16x32xf32> to vector<16x32xbf16>
    %cst_38 = arith.constant dense<0.000000e+00> : vector<16x32xf32>
    %51 = tpu.matmul %20, %50, %cst_38 {dimension_numbers = #tpu.dot_dimension_numbers<[1], [0], [0], [1], [0, 0, 1, 1], [], []>} : vector<16x16xbf16>, vector<16x32xbf16>, vector<16x32xf32> -> vector<16x32xf32>
    %52 = arith.addf %51, %16 : vector<16x32xf32>
    %cst_39 = arith.constant 5.000000e-01 : f32
    %53 = vector.broadcast %cst_39 : f32 to vector<16x32xf32>
    %54 = arith.mulf %53, %52 : vector<16x32xf32>
    %cst_40 = arith.constant 0.707106769 : f32
    %55 = vector.broadcast %cst_40 : f32 to vector<16x32xf32>
    %56 = arith.mulf %52, %55 : vector<16x32xf32>
    %57 = math.erf %56 : vector<16x32xf32>
    %cst_41 = arith.constant 1.000000e+00 : f32
    %58 = vector.broadcast %cst_41 : f32 to vector<16x32xf32>
    %59 = arith.addf %58, %57 : vector<16x32xf32>
    %60 = arith.mulf %54, %59 : vector<16x32xf32>
    %61 = arith.truncf %60 : vector<16x32xf32> to vector<16x32xbf16>
    %cst_42 = arith.constant dense<0.000000e+00> : vector<16x32xf32>
    %62 = tpu.matmul %22, %61, %cst_42 {dimension_numbers = #tpu.dot_dimension_numbers<[1], [0], [0], [1], [0, 0, 1, 1], [], []>} : vector<16x16xbf16>, vector<16x32xbf16>, vector<16x32xf32> -> vector<16x32xf32>
    %63 = arith.addf %62, %18 : vector<16x32xf32>
    %c0_43 = arith.constant 0 : index
    %c0_44 = arith.constant 0 : index
    %64 = vector.load %arg13[%c0_43, %c0_44] : memref<32x32xf32, #tpu.memory_space<vmem>>, vector<16x32xf32>
    tpu.vector_store %arg13[%c0_43, %c0_44], %63 {strides = array<i32>} : memref<32x32xf32, #tpu.memory_space<vmem>>, vector<16x32xf32>,
    %65 = vector.extract_strided_slice %48 {offsets = [16, 0], sizes = [16, 32], strides = [1, 1]} : vector<32x32xf32> to vector<16x32xf32>
    %66 = arith.truncf %65 : vector<16x32xf32> to vector<16x32xbf16>
    %cst_45 = arith.constant dense<0.000000e+00> : vector<16x32xf32>
    %67 = tpu.matmul %20, %66, %cst_45 {dimension_numbers = #tpu.dot_dimension_numbers<[1], [0], [0], [1], [0, 0, 1, 1], [], []>} : vector<16x16xbf16>, vector<16x32xbf16>, vector<16x32xf32> -> vector<16x32xf32>
    %68 = arith.addf %67, %16 : vector<16x32xf32>
    %cst_46 = arith.constant 5.000000e-01 : f32
    %69 = vector.broadcast %cst_46 : f32 to vector<16x32xf32>
    %70 = arith.mulf %69, %68 : vector<16x32xf32>
    %cst_47 = arith.constant 0.707106769 : f32
    %71 = vector.broadcast %cst_47 : f32 to vector<16x32xf32>
    %72 = arith.mulf %68, %71 : vector<16x32xf32>
    %73 = math.erf %72 : vector<16x32xf32>
    %cst_48 = arith.constant 1.000000e+00 : f32
    %74 = vector.broadcast %cst_48 : f32 to vector<16x32xf32>
    %75 = arith.addf %74, %73 : vector<16x32xf32>
    %76 = arith.mulf %70, %75 : vector<16x32xf32>
    %77 = arith.truncf %76 : vector<16x32xf32> to vector<16x32xbf16>
    %cst_49 = arith.constant dense<0.000000e+00> : vector<16x32xf32>
    %78 = tpu.matmul %22, %77, %cst_49 {dimension_numbers = #tpu.dot_dimension_numbers<[1], [0], [0], [1], [0, 0, 1, 1], [], []>} : vector<16x16xbf16>, vector<16x32xbf16>, vector<16x32xf32> -> vector<16x32xf32>
    %79 = arith.addf %78, %18 : vector<16x32xf32>
    %c16 = arith.constant 16 : index
    %c0_50 = arith.constant 0 : index
    %80 = vector.load %arg13[%c16, %c0_50] : memref<32x32xf32, #tpu.memory_space<vmem>>, vector<16x32xf32>
    tpu.vector_store %arg13[%c16, %c0_50], %79 {strides = array<i32>} : memref<32x32xf32, #tpu.memory_space<vmem>>, vector<16x32xf32>,
    %c0_51 = arith.constant 0 : index
    %c0_52 = arith.constant 0 : index
    %81 = vector.load %arg13[%c0_51, %c0_52] : memref<32x32xf32, #tpu.memory_space<vmem>>, vector<32x32xf32>
    %82 = arith.addf %8, %81 : vector<32x32xf32>
    %cst_53 = arith.constant dense<0.000000e+00> : vector<32xf32>
    %83 = vector.multi_reduction <add>, %82, %cst_53 [1] : vector<32x32xf32> to vector<32xf32>
    %84 = vector.shape_cast %83 : vector<32xf32> to vector<32x1xf32>
    %cst_54 = arith.constant 3.200000e+01 : f32
    %85 = vector.broadcast %cst_54 : f32 to vector<32x1xf32>
    %86 = arith.divf %84, %85 : vector<32x1xf32>
    %87 = vector.broadcast %86 : vector<32x1xf32> to vector<32x32xf32>
    %88 = arith.subf %82, %87 : vector<32x32xf32>
    %89 = arith.mulf %88, %88 : vector<32x32xf32>
    %cst_55 = arith.constant dense<0.000000e+00> : vector<32xf32>
    %90 = vector.multi_reduction <add>, %89, %cst_55 [1] : vector<32x32xf32> to vector<32xf32>
    %91 = vector.shape_cast %90 : vector<32xf32> to vector<32x1xf32>
    %cst_56 = arith.constant 3.200000e+01 : f32
    %92 = vector.broadcast %cst_56 : f32 to vector<32x1xf32>
    %93 = arith.divf %91, %92 : vector<32x1xf32>
    %94 = vector.broadcast %86 : vector<32x1xf32> to vector<32x32xf32>
    %95 = arith.subf %82, %94 : vector<32x32xf32>
    %cst_57 = arith.constant 9.99999974E-6 : f32
    %96 = vector.broadcast %cst_57 : f32 to vector<32x1xf32>
    %97 = arith.addf %93, %96 : vector<32x1xf32>
    %98 = math.rsqrt %97 : vector<32x1xf32>
    %99 = vector.broadcast %98 : vector<32x1xf32> to vector<32x32xf32>
    %100 = arith.mulf %95, %99 : vector<32x32xf32>
    %101 = vector.broadcast %11 : vector<1x32xf32> to vector<32x32xf32>
    %102 = arith.mulf %100, %101 : vector<32x32xf32>
    %103 = vector.broadcast %12 : vector<1x32xf32> to vector<32x32xf32>
    %104 = arith.addf %102, %103 : vector<32x32xf32>
    %105 = arith.truncf %104 : vector<32x32xf32> to vector<32x32xbf16>
    %cst_58 = arith.constant dense<0.000000e+00> : vector<32x64xf32>
    %106 = tpu.matmul %105, %24, %cst_58 {dimension_numbers = #tpu.dot_dimension_numbers<[1], [0], [0], [1], [0, 0, 1, 1], [], []>} : vector<32x32xbf16>, vector<32x64xbf16>, vector<32x64xf32> -> vector<32x64xf32>
    %107 = vector.broadcast %14 : vector<1x64xf32> to vector<32x64xf32>
    %108 = arith.addf %106, %107 : vector<32x64xf32>
    %cst_59 = arith.constant 5.000000e-01 : f32
    %109 = vector.broadcast %cst_59 : f32 to vector<32x64xf32>
    %110 = arith.mulf %109, %108 : vector<32x64xf32>
    %cst_60 = arith.constant 0.707106769 : f32
    %111 = vector.broadcast %cst_60 : f32 to vector<32x64xf32>
    %112 = arith.mulf %108, %111 : vector<32x64xf32>
    %113 = math.erf %112 : vector<32x64xf32>
    %cst_61 = arith.constant 1.000000e+00 : f32
    %114 = vector.broadcast %cst_61 : f32 to vector<32x64xf32>
    %115 = arith.addf %114, %113 : vector<32x64xf32>
    %116 = arith.mulf %110, %115 : vector<32x64xf32>
    %117 = arith.truncf %116 : vector<32x64xf32> to vector<32x64xbf16>
    %cst_62 = arith.constant dense<0.000000e+00> : vector<32x32xf32>
    %118 = tpu.matmul %117, %26, %cst_62 {dimension_numbers = #tpu.dot_dimension_numbers<[1], [0], [0], [1], [0, 0, 1, 1], [], []>} : vector<32x64xbf16>, vector<64x32xbf16>, vector<32x32xf32> -> vector<32x32xf32>
    %119 = vector.broadcast %13 : vector<1x32xf32> to vector<32x32xf32>
    %120 = arith.addf %118, %119 : vector<32x32xf32>
    %121 = arith.addf %82, %120 : vector<32x32xf32>
    %c4 = arith.constant 4 : index
    %c0_63 = arith.constant 0 : index
    %122 = vector.load %arg3[%c4, %c0_63] : memref<13x32xf32, #tpu.memory_space<vmem>>, vector<1x32xf32>
    %c6 = arith.constant 6 : index
    %c0_64 = arith.constant 0 : index
    %123 = vector.load %arg3[%c6, %c0_64] : memref<13x32xf32, #tpu.memory_space<vmem>>, vector<1x32xf32>
    %c8 = arith.constant 8 : index
    %c0_65 = arith.constant 0 : index
    %124 = vector.load %arg3[%c8, %c0_65] : memref<13x32xf32, #tpu.memory_space<vmem>>, vector<1x32xf32>
    %c10 = arith.constant 10 : index
    %c0_66 = arith.constant 0 : index
    %125 = vector.load %arg3[%c10, %c0_66] : memref<13x32xf32, #tpu.memory_space<vmem>>, vector<1x32xf32>
    %c12 = arith.constant 12 : index
    %c0_67 = arith.constant 0 : index
    %126 = vector.load %arg3[%c12, %c0_67] : memref<13x32xf32, #tpu.memory_space<vmem>>, vector<1x32xf32>
    %c1_68 = arith.constant 1 : index
    %c0_69 = arith.constant 0 : index
    %127 = vector.load %arg6[%c1_68, %c0_69] : memref<2x64xf32, #tpu.memory_space<vmem>>, vector<1x64xf32>
    %c1_70 = arith.constant 1 : index
    %c0_71 = arith.constant 0 : index
    %c0_72 = arith.constant 0 : index
    %128 = vector.load %arg4[%c1_70, %c0_71, %c0_72] : memref<2x16x32xf32, #tpu.memory_space<vmem>>, vector<1x16x32xf32>
    %129 = vector.shape_cast %128 : vector<1x16x32xf32> to vector<16x32xf32>
    %c1_73 = arith.constant 1 : index
    %c0_74 = arith.constant 0 : index
    %c0_75 = arith.constant 0 : index
    %130 = vector.load %arg5[%c1_73, %c0_74, %c0_75] : memref<2x16x32xf32, #tpu.memory_space<vmem>>, vector<1x16x32xf32>
    %131 = vector.shape_cast %130 : vector<1x16x32xf32> to vector<16x32xf32>
    %c1_76 = arith.constant 1 : index
    %c0_77 = arith.constant 0 : index
    %c0_78 = arith.constant 0 : index
    %132 = vector.load %arg7[%c1_76, %c0_77, %c0_78] : memref<2x16x16xbf16, #tpu.memory_space<vmem>>, vector<1x16x16xbf16>
    %133 = vector.shape_cast %132 : vector<1x16x16xbf16> to vector<16x16xbf16>
    %c1_79 = arith.constant 1 : index
    %c0_80 = arith.constant 0 : index
    %c0_81 = arith.constant 0 : index
    %134 = vector.load %arg8[%c1_79, %c0_80, %c0_81] : memref<2x16x16xbf16, #tpu.memory_space<vmem>>, vector<1x16x16xbf16>
    %135 = vector.shape_cast %134 : vector<1x16x16xbf16> to vector<16x16xbf16>
    %c1_82 = arith.constant 1 : index
    %c0_83 = arith.constant 0 : index
    %c0_84 = arith.constant 0 : index
    %136 = vector.load %arg9[%c1_82, %c0_83, %c0_84] : memref<2x32x64xbf16, #tpu.memory_space<vmem>>, vector<1x32x64xbf16>
    %137 = vector.shape_cast %136 : vector<1x32x64xbf16> to vector<32x64xbf16>
    %c1_85 = arith.constant 1 : index
    %c0_86 = arith.constant 0 : index
    %c0_87 = arith.constant 0 : index
    %138 = vector.load %arg10[%c1_85, %c0_86, %c0_87] : memref<2x64x32xbf16, #tpu.memory_space<vmem>>, vector<1x64x32xbf16>
    %139 = vector.shape_cast %138 : vector<1x64x32xbf16> to vector<64x32xbf16>
    %cst_88 = arith.constant dense<0.000000e+00> : vector<32xf32>
    %140 = vector.multi_reduction <add>, %121, %cst_88 [1] : vector<32x32xf32> to vector<32xf32>
    %141 = vector.shape_cast %140 : vector<32xf32> to vector<32x1xf32>
    %cst_89 = arith.constant 3.200000e+01 : f32
    %142 = vector.broadcast %cst_89 : f32 to vector<32x1xf32>
    %143 = arith.divf %141, %142 : vector<32x1xf32>
    %144 = vector.broadcast %143 : vector<32x1xf32> to vector<32x32xf32>
    %145 = arith.subf %121, %144 : vector<32x32xf32>
    %146 = arith.mulf %145, %145 : vector<32x32xf32>
    %cst_90 = arith.constant dense<0.000000e+00> : vector<32xf32>
    %147 = vector.multi_reduction <add>, %146, %cst_90 [1] : vector<32x32xf32> to vector<32xf32>
    %148 = vector.shape_cast %147 : vector<32xf32> to vector<32x1xf32>
    %cst_91 = arith.constant 3.200000e+01 : f32
    %149 = vector.broadcast %cst_91 : f32 to vector<32x1xf32>
    %150 = arith.divf %148, %149 : vector<32x1xf32>
    %151 = vector.broadcast %143 : vector<32x1xf32> to vector<32x32xf32>
    %152 = arith.subf %121, %151 : vector<32x32xf32>
    %cst_92 = arith.constant 9.99999974E-6 : f32
    %153 = vector.broadcast %cst_92 : f32 to vector<32x1xf32>
    %154 = arith.addf %150, %153 : vector<32x1xf32>
    %155 = math.rsqrt %154 : vector<32x1xf32>
    %156 = vector.broadcast %155 : vector<32x1xf32> to vector<32x32xf32>
    %157 = arith.mulf %152, %156 : vector<32x32xf32>
    %158 = vector.broadcast %122 : vector<1x32xf32> to vector<32x32xf32>
    %159 = arith.mulf %157, %158 : vector<32x32xf32>
    %160 = vector.broadcast %123 : vector<1x32xf32> to vector<32x32xf32>
    %161 = arith.addf %159, %160 : vector<32x32xf32>
    %162 = vector.extract_strided_slice %161 {offsets = [0, 0], sizes = [16, 32], strides = [1, 1]} : vector<32x32xf32> to vector<16x32xf32>
    %163 = arith.truncf %162 : vector<16x32xf32> to vector<16x32xbf16>
    %cst_93 = arith.constant dense<0.000000e+00> : vector<16x32xf32>
    %164 = tpu.matmul %133, %163, %cst_93 {dimension_numbers = #tpu.dot_dimension_numbers<[1], [0], [0], [1], [0, 0, 1, 1], [], []>} : vector<16x16xbf16>, vector<16x32xbf16>, vector<16x32xf32> -> vector<16x32xf32>
    %165 = arith.addf %164, %129 : vector<16x32xf32>
    %cst_94 = arith.constant 5.000000e-01 : f32
    %166 = vector.broadcast %cst_94 : f32 to vector<16x32xf32>
    %167 = arith.mulf %166, %165 : vector<16x32xf32>
    %cst_95 = arith.constant 0.707106769 : f32
    %168 = vector.broadcast %cst_95 : f32 to vector<16x32xf32>
    %169 = arith.mulf %165, %168 : vector<16x32xf32>
    %170 = math.erf %169 : vector<16x32xf32>
    %cst_96 = arith.constant 1.000000e+00 : f32
    %171 = vector.broadcast %cst_96 : f32 to vector<16x32xf32>
    %172 = arith.addf %171, %170 : vector<16x32xf32>
    %173 = arith.mulf %167, %172 : vector<16x32xf32>
    %174 = arith.truncf %173 : vector<16x32xf32> to vector<16x32xbf16>
    %cst_97 = arith.constant dense<0.000000e+00> : vector<16x32xf32>
    %175 = tpu.matmul %135, %174, %cst_97 {dimension_numbers = #tpu.dot_dimension_numbers<[1], [0], [0], [1], [0, 0, 1, 1], [], []>} : vector<16x16xbf16>, vector<16x32xbf16>, vector<16x32xf32> -> vector<16x32xf32>
    %176 = arith.addf %175, %131 : vector<16x32xf32>
    %c0_98 = arith.constant 0 : index
    %c0_99 = arith.constant 0 : index
    %177 = vector.load %arg13[%c0_98, %c0_99] : memref<32x32xf32, #tpu.memory_space<vmem>>, vector<16x32xf32>
    tpu.vector_store %arg13[%c0_98, %c0_99], %176 {strides = array<i32>} : memref<32x32xf32, #tpu.memory_space<vmem>>, vector<16x32xf32>,
    %178 = vector.extract_strided_slice %161 {offsets = [16, 0], sizes = [16, 32], strides = [1, 1]} : vector<32x32xf32> to vector<16x32xf32>
    %179 = arith.truncf %178 : vector<16x32xf32> to vector<16x32xbf16>
    %cst_100 = arith.constant dense<0.000000e+00> : vector<16x32xf32>
    %180 = tpu.matmul %133, %179, %cst_100 {dimension_numbers = #tpu.dot_dimension_numbers<[1], [0], [0], [1], [0, 0, 1, 1], [], []>} : vector<16x16xbf16>, vector<16x32xbf16>, vector<16x32xf32> -> vector<16x32xf32>
    %181 = arith.addf %180, %129 : vector<16x32xf32>
    %cst_101 = arith.constant 5.000000e-01 : f32
    %182 = vector.broadcast %cst_101 : f32 to vector<16x32xf32>
    %183 = arith.mulf %182, %181 : vector<16x32xf32>
    %cst_102 = arith.constant 0.707106769 : f32
    %184 = vector.broadcast %cst_102 : f32 to vector<16x32xf32>
    %185 = arith.mulf %181, %184 : vector<16x32xf32>
    %186 = math.erf %185 : vector<16x32xf32>
    %cst_103 = arith.constant 1.000000e+00 : f32
    %187 = vector.broadcast %cst_103 : f32 to vector<16x32xf32>
    %188 = arith.addf %187, %186 : vector<16x32xf32>
    %189 = arith.mulf %183, %188 : vector<16x32xf32>
    %190 = arith.truncf %189 : vector<16x32xf32> to vector<16x32xbf16>
    %cst_104 = arith.constant dense<0.000000e+00> : vector<16x32xf32>
    %191 = tpu.matmul %135, %190, %cst_104 {dimension_numbers = #tpu.dot_dimension_numbers<[1], [0], [0], [1], [0, 0, 1, 1], [], []>} : vector<16x16xbf16>, vector<16x32xbf16>, vector<16x32xf32> -> vector<16x32xf32>
    %192 = arith.addf %191, %131 : vector<16x32xf32>
    %c16_105 = arith.constant 16 : index
    %c0_106 = arith.constant 0 : index
    %193 = vector.load %arg13[%c16_105, %c0_106] : memref<32x32xf32, #tpu.memory_space<vmem>>, vector<16x32xf32>
    tpu.vector_store %arg13[%c16_105, %c0_106], %192 {strides = array<i32>} : memref<32x32xf32, #tpu.memory_space<vmem>>, vector<16x32xf32>,
    %c0_107 = arith.constant 0 : index
    %c0_108 = arith.constant 0 : index
    %194 = vector.load %arg13[%c0_107, %c0_108] : memref<32x32xf32, #tpu.memory_space<vmem>>, vector<32x32xf32>
    %195 = arith.addf %121, %194 : vector<32x32xf32>
    %cst_109 = arith.constant dense<0.000000e+00> : vector<32xf32>
    %196 = vector.multi_reduction <add>, %195, %cst_109 [1] : vector<32x32xf32> to vector<32xf32>
    %197 = vector.shape_cast %196 : vector<32xf32> to vector<32x1xf32>
    %cst_110 = arith.constant 3.200000e+01 : f32
    %198 = vector.broadcast %cst_110 : f32 to vector<32x1xf32>
    %199 = arith.divf %197, %198 : vector<32x1xf32>
    %200 = vector.broadcast %199 : vector<32x1xf32> to vector<32x32xf32>
    %201 = arith.subf %195, %200 : vector<32x32xf32>
    %202 = arith.mulf %201, %201 : vector<32x32xf32>
    %cst_111 = arith.constant dense<0.000000e+00> : vector<32xf32>
    %203 = vector.multi_reduction <add>, %202, %cst_111 [1] : vector<32x32xf32> to vector<32xf32>
    %204 = vector.shape_cast %203 : vector<32xf32> to vector<32x1xf32>
    %cst_112 = arith.constant 3.200000e+01 : f32
    %205 = vector.broadcast %cst_112 : f32 to vector<32x1xf32>
    %206 = arith.divf %204, %205 : vector<32x1xf32>
    %207 = vector.broadcast %199 : vector<32x1xf32> to vector<32x32xf32>
    %208 = arith.subf %195, %207 : vector<32x32xf32>
    %cst_113 = arith.constant 9.99999974E-6 : f32
    %209 = vector.broadcast %cst_113 : f32 to vector<32x1xf32>
    %210 = arith.addf %206, %209 : vector<32x1xf32>
    %211 = math.rsqrt %210 : vector<32x1xf32>
    %212 = vector.broadcast %211 : vector<32x1xf32> to vector<32x32xf32>
    %213 = arith.mulf %208, %212 : vector<32x32xf32>
    %214 = vector.broadcast %124 : vector<1x32xf32> to vector<32x32xf32>
    %215 = arith.mulf %213, %214 : vector<32x32xf32>
    %216 = vector.broadcast %125 : vector<1x32xf32> to vector<32x32xf32>
    %217 = arith.addf %215, %216 : vector<32x32xf32>
    %218 = arith.truncf %217 : vector<32x32xf32> to vector<32x32xbf16>
    %cst_114 = arith.constant dense<0.000000e+00> : vector<32x64xf32>
    %219 = tpu.matmul %218, %137, %cst_114 {dimension_numbers = #tpu.dot_dimension_numbers<[1], [0], [0], [1], [0, 0, 1, 1], [], []>} : vector<32x32xbf16>, vector<32x64xbf16>, vector<32x64xf32> -> vector<32x64xf32>
    %220 = vector.broadcast %127 : vector<1x64xf32> to vector<32x64xf32>
    %221 = arith.addf %219, %220 : vector<32x64xf32>
    %cst_115 = arith.constant 5.000000e-01 : f32
    %222 = vector.broadcast %cst_115 : f32 to vector<32x64xf32>
    %223 = arith.mulf %222, %221 : vector<32x64xf32>
    %cst_116 = arith.constant 0.707106769 : f32
    %224 = vector.broadcast %cst_116 : f32 to vector<32x64xf32>
    %225 = arith.mulf %221, %224 : vector<32x64xf32>
    %226 = math.erf %225 : vector<32x64xf32>
    %cst_117 = arith.constant 1.000000e+00 : f32
    %227 = vector.broadcast %cst_117 : f32 to vector<32x64xf32>
    %228 = arith.addf %227, %226 : vector<32x64xf32>
    %229 = arith.mulf %223, %228 : vector<32x64xf32>
    %230 = arith.truncf %229 : vector<32x64xf32> to vector<32x64xbf16>
    %cst_118 = arith.constant dense<0.000000e+00> : vector<32x32xf32>
    %231 = tpu.matmul %230, %139, %cst_118 {dimension_numbers = #tpu.dot_dimension_numbers<[1], [0], [0], [1], [0, 0, 1, 1], [], []>} : vector<32x64xbf16>, vector<64x32xbf16>, vector<32x32xf32> -> vector<32x32xf32>
    %232 = vector.broadcast %126 : vector<1x32xf32> to vector<32x32xf32>
    %233 = arith.addf %231, %232 : vector<32x32xf32>
    %234 = arith.addf %195, %233 : vector<32x32xf32>
    %cst_119 = arith.constant dense<0.000000e+00> : vector<32xf32>
    %235 = vector.multi_reduction <add>, %234, %cst_119 [1] : vector<32x32xf32> to vector<32xf32>
    %236 = vector.shape_cast %235 : vector<32xf32> to vector<32x1xf32>
    %cst_120 = arith.constant 3.200000e+01 : f32
    %237 = vector.broadcast %cst_120 : f32 to vector<32x1xf32>
    %238 = arith.divf %236, %237 : vector<32x1xf32>
    %239 = vector.broadcast %238 : vector<32x1xf32> to vector<32x32xf32>
    %240 = arith.subf %234, %239 : vector<32x32xf32>
    %241 = arith.mulf %240, %240 : vector<32x32xf32>
    %cst_121 = arith.constant dense<0.000000e+00> : vector<32xf32>
    %242 = vector.multi_reduction <add>, %241, %cst_121 [1] : vector<32x32xf32> to vector<32xf32>
    %243 = vector.shape_cast %242 : vector<32xf32> to vector<32x1xf32>
    %cst_122 = arith.constant 3.200000e+01 : f32
    %244 = vector.broadcast %cst_122 : f32 to vector<32x1xf32>
    %245 = arith.divf %243, %244 : vector<32x1xf32>
    %246 = vector.broadcast %238 : vector<32x1xf32> to vector<32x32xf32>
    %247 = arith.subf %234, %246 : vector<32x32xf32>
    %cst_123 = arith.constant 9.99999974E-6 : f32
    %248 = vector.broadcast %cst_123 : f32 to vector<32x1xf32>
    %249 = arith.addf %245, %248 : vector<32x1xf32>
    %250 = math.rsqrt %249 : vector<32x1xf32>
    %251 = vector.broadcast %250 : vector<32x1xf32> to vector<32x32xf32>
    %252 = arith.mulf %247, %251 : vector<32x32xf32>
    %253 = vector.broadcast %1 : vector<1x32xf32> to vector<32x32xf32>
    %254 = arith.mulf %252, %253 : vector<32x32xf32>
    %255 = vector.broadcast %2 : vector<1x32xf32> to vector<32x32xf32>
    %256 = arith.addf %254, %255 : vector<32x32xf32>
    %c0_124 = arith.constant 0 : index
    %c0_125 = arith.constant 0 : index
    %257 = vector.load %arg11[%c0_124, %c0_125] : memref<2x32xf32, #tpu.memory_space<vmem>>, vector<2x32xf32>
    %cst_126 = arith.constant dense<0.000000e+00> : vector<2x32xf32>
    %258 = tpu.matmul %257, %256, %cst_126 {dimension_numbers = #tpu.dot_dimension_numbers<[1], [0], [0], [1], [0, 0, 1, 1], [], []>} : vector<2x32xf32>, vector<32x32xf32>, vector<2x32xf32> -> vector<2x32xf32>
    %c0_127 = arith.constant 0 : index
    %c0_128 = arith.constant 0 : index
    %c0_129 = arith.constant 0 : index
    %259 = vector.load %arg12[%c0_127, %c0_128, %c0_129] : memref<1x2x32xf32, #tpu.memory_space<vmem>>, vector<1x2x32xf32>
    %260 = vector.shape_cast %259 : vector<1x2x32xf32> to vector<2x32xf32>
    %261 = vector.shape_cast %258 : vector<2x32xf32> to vector<1x2x32xf32>
    tpu.vector_store %arg12[%c0_127, %c0_128, %c0_129], %261 {strides = array<i32>} : memref<1x2x32xf32, #tpu.memory_space<vmem>>, vector<1x2x32xf32>,
    return
  }
  func.func @transform_0(%arg0: i32) -> (i32, i32, i32) {
    %c0_i32 = arith.constant 0 : i32
    %c0_i32_0 = arith.constant 0 : i32
    %c0_i32_1 = arith.constant 0 : i32
    return %arg0, %c0_i32, %c0_i32_0 : i32, i32, i32
  }
  func.func @transform_1(%arg0: i32) -> (i32, i32) {
    %c0_i32 = arith.constant 0 : i32
    %c0_i32_0 = arith.constant 0 : i32
    %c0_i32_1 = arith.constant 0 : i32
    return %c0_i32, %c0_i32_0 : i32, i32
  }
  func.func @transform_2(%arg0: i32) -> (i32, i32) {
    %c0_i32 = arith.constant 0 : i32
    %c0_i32_0 = arith.constant 0 : i32
    %c0_i32_1 = arith.constant 0 : i32
    return %c0_i32, %c0_i32_0 : i32, i32
  }
  func.func @transform_3(%arg0: i32) -> (i32, i32, i32) {
    %c0_i32 = arith.constant 0 : i32
    %c0_i32_0 = arith.constant 0 : i32
    %c0_i32_1 = arith.constant 0 : i32
    %c0_i32_2 = arith.constant 0 : i32
    return %c0_i32, %c0_i32_0, %c0_i32_1 : i32, i32, i32
  }
  func.func @transform_4(%arg0: i32) -> (i32, i32, i32) {
    %c0_i32 = arith.constant 0 : i32
    %c0_i32_0 = arith.constant 0 : i32
    %c0_i32_1 = arith.constant 0 : i32
    %c0_i32_2 = arith.constant 0 : i32
    return %c0_i32, %c0_i32_0, %c0_i32_1 : i32, i32, i32
  }
  func.func @transform_5(%arg0: i32) -> (i32, i32) {
    %c0_i32 = arith.constant 0 : i32
    %c0_i32_0 = arith.constant 0 : i32
    %c0_i32_1 = arith.constant 0 : i32
    return %c0_i32, %c0_i32_0 : i32, i32
  }
  func.func @transform_6(%arg0: i32) -> (i32, i32, i32) {
    %c0_i32 = arith.constant 0 : i32
    %c0_i32_0 = arith.constant 0 : i32
    %c0_i32_1 = arith.constant 0 : i32
    %c0_i32_2 = arith.constant 0 : i32
    return %c0_i32, %c0_i32_0, %c0_i32_1 : i32, i32, i32
  }
  func.func @transform_7(%arg0: i32) -> (i32, i32, i32) {
    %c0_i32 = arith.constant 0 : i32
    %c0_i32_0 = arith.constant 0 : i32
    %c0_i32_1 = arith.constant 0 : i32
    %c0_i32_2 = arith.constant 0 : i32
    return %c0_i32, %c0_i32_0, %c0_i32_1 : i32, i32, i32
  }
  func.func @transform_8(%arg0: i32) -> (i32, i32, i32) {
    %c0_i32 = arith.constant 0 : i32
    %c0_i32_0 = arith.constant 0 : i32
    %c0_i32_1 = arith.constant 0 : i32
    %c0_i32_2 = arith.constant 0 : i32
    return %c0_i32, %c0_i32_0, %c0_i32_1 : i32, i32, i32
  }
  func.func @transform_9(%arg0: i32) -> (i32, i32, i32) {
    %c0_i32 = arith.constant 0 : i32
    %c0_i32_0 = arith.constant 0 : i32
    %c0_i32_1 = arith.constant 0 : i32
    %c0_i32_2 = arith.constant 0 : i32
    return %c0_i32, %c0_i32_0, %c0_i32_1 : i32, i32, i32
  }
  func.func @transform_10(%arg0: i32) -> (i32, i32) {
    %c0_i32 = arith.constant 0 : i32
    %c0_i32_0 = arith.constant 0 : i32
    %c0_i32_1 = arith.constant 0 : i32
    return %c0_i32, %c0_i32_0 : i32, i32
  }
  func.func @transform_11(%arg0: i32) -> (i32, i32, i32) {
    %c0_i32 = arith.constant 0 : i32
    %c0_i32_0 = arith.constant 0 : i32
    %c0_i32_1 = arith.constant 0 : i32
    return %arg0, %c0_i32, %c0_i32_0 : i32, i32, i32
  }
}

</mosaic_0001>

<llo_original>
// kernel: tpu_custom_call.1
$region0: #{tpu_custom_call.1}
  #allocation0 [shape = 'u32[]', space=smem, size = 0x4, offset = 0x4, fixed_abs, tag = 'smem constant byte address 0x4 - core index']
  #allocation1 [shape = 'u32[144,128]{1,0:T(1,128)}', space=vmem, size = 0x12000, scoped, tag = 'internal scratch']
  #allocation2 [shape = 'f32[32,32]{1,0:T(8,128)}', space=vmem, size = 0x4000, scoped, tag = 'scratch operand']
  %s0 = inlined_call_operand.vmem [shape: bf16[1,32,64], index: 0, kind: input, shape index: {}]
  %s1 = inlined_call_operand.vmem [shape: bf16[64,32], index: 1, kind: input, shape index: {}]
  %s2 = inlined_call_operand.vmem [shape: f32[13,32], index: 2, kind: input, shape index: {}]
  %s3 = inlined_call_operand.vmem [shape: f32[2,16,32], index: 3, kind: input, shape index: {}]
  %s4 = inlined_call_operand.vmem [shape: f32[2,16,32], index: 4, kind: input, shape index: {}]
  %s5 = inlined_call_operand.hbm [shape: f32[2,64], index: 5, kind: input, shape index: {}]
  %s6 = inlined_call_operand.hbm [shape: bf16[2,16,16], index: 6, kind: input, shape index: {}]
  %s7 = inlined_call_operand.hbm [shape: bf16[2,16,16], index: 7, kind: input, shape index: {}]
  %s8 = inlined_call_operand.vmem [shape: bf16[2,32,64], index: 8, kind: input, shape index: {}]
  %s9 = inlined_call_operand.vmem [shape: bf16[2,64,32], index: 9, kind: input, shape index: {}]
  %s10 = inlined_call_operand.vmem [shape: f32[2,32], index: 10, kind: input, shape index: {}]
  %s11 = inlined_call_operand.hbm [shape: f32[1,2,32], index: 11, kind: output, shape index: {}]
  %s12 = sld [smem:[#allocation0]]
  $region66: #{tpu_custom_call.1} parent=0
    _
  %s14 = ssub.s32 1, %s12
  %s15 = scalar_select 0, %s14, %s12
  $region1: #{tpu_custom_call.1} parent=0
    #allocation3 [shape = 'u8[1024]{0}', space=vmem, size = 0x400, scoped, tag = 'input window, operand 5, single buffered']
    #allocation4 [shape = 's32[1]{0}', space=sflag, size = 0x4, scoped, tag = 'scoped memory for tpu_custom_call.1']
    #allocation5 [shape = 's32[1]{0}', space=sflag, size = 0x4, scoped, tag = 'scoped memory for tpu_custom_call.1']
    #allocation6 [shape = 'u8[8192]{0}', space=vmem, size = 0x2000, scoped, tag = 'input window, operand 6, single buffered']
    #allocation7 [shape = 's32[1]{0}', space=sflag, size = 0x4, scoped, tag = 'scoped memory for tpu_custom_call.1']
    #allocation8 [shape = 'u8[8192]{0}', space=vmem, size = 0x2000, scoped, tag = 'input window, operand 7, single buffered']
    #allocation9 [shape = 'u8[1024]{0}', space=vmem, size = 0x400, scoped, tag = 'output window, operand 0, single buffered']
    %16 = vsyncpa [#allocation4], 0
    %17 = vsyncpa [#allocation7], 0
    %18 = vsyncpa [#allocation5], 0
    // Predicated region
    $region2: #{tpu_custom_call.1} parent=1 // pred_check
      _
    $region3: #{tpu_custom_call.1} parent=1 // pred_check_branch
      %20 = sbr.rel (0) target = $region5
    $region4: #{tpu_custom_call.1} parent=1 // pred_region
      _
    $region5: #{tpu_custom_call.1} parent=1 // pred_fallthru
      _
    // Predicated region
    $region6: #{tpu_custom_call.1} parent=1 // pred_check
      _
    $region7: #{tpu_custom_call.1} parent=1 // pred_check_branch
      %22 = sbr.rel (0) target = $region9
    $region8: #{tpu_custom_call.1} parent=1 // pred_region
      _
    $region9: #{tpu_custom_call.1} parent=1 // pred_fallthru
      _
    // Predicated region
    $region10: #{tpu_custom_call.1} parent=1 // pred_check
      _
    $region11: #{tpu_custom_call.1} parent=1 // pred_check_branch
      %24 = sbr.rel (0) target = $region13
    $region12: #{tpu_custom_call.1} parent=1 // pred_region
      _
    $region13: #{tpu_custom_call.1} parent=1 // pred_fallthru
      _
    // Predicated region
    $region14: #{tpu_custom_call.1} parent=1 // pred_check
      _
    $region15: #{tpu_custom_call.1} parent=1 // pred_check_branch
      %26 = sbr.rel (0) target = $region17
    $region16: #{tpu_custom_call.1} parent=1 // pred_region
      _
    $region17: #{tpu_custom_call.1} parent=1 // pred_fallthru
      _
    // Predicated region
    $region18: #{tpu_custom_call.1} parent=1 // pred_check
      _
    $region19: #{tpu_custom_call.1} parent=1 // pred_check_branch
      %28 = sbr.rel (0) target = $region21
    $region20: #{tpu_custom_call.1} parent=1 // pred_region
      _
    $region21: #{tpu_custom_call.1} parent=1 // pred_fallthru
      _
    // Predicated region
    $region22: #{tpu_custom_call.1} parent=1 // pred_check
      _
    $region23: #{tpu_custom_call.1} parent=1 // pred_check_branch
      %30 = sbr.rel (0) target = $region25
    $region24: #{tpu_custom_call.1} parent=1 // pred_region
      %s32 = ssub.s32 32, 32
      %33 = vsyncadd [#allocation4], %s32
      %s35 = sshll.u32 [#allocation3], 4
      %s36 = int_to_ptr.vmem [resolvable:$true] %s35
      %38 = dma.hbm_to_vmem [thread:$0]  %s5, 32, %s36, [#allocation4]
    $region25: #{tpu_custom_call.1} parent=1 // pred_fallthru
      _
    // Predicated region
    $region26: #{tpu_custom_call.1} parent=1 // pred_check
      _
    $region27: #{tpu_custom_call.1} parent=1 // pred_check_branch
      %40 = sbr.rel (0) target = $region29
    $region28: #{tpu_custom_call.1} parent=1 // pred_region
      %s42 = ssub.s32 256, 256
      %43 = vsyncadd [#allocation7], %s42
      %s44 = sshll.u32 [#allocation6], 4
      %s45 = int_to_ptr.vmem [resolvable:$true] %s44
      %50 = dma.hbm_to_vmem [thread:$0]  %s6, 256, %s45, [#allocation7], 64, 64, 4
    $region29: #{tpu_custom_call.1} parent=1 // pred_fallthru
      _
    // Predicated region
    $region30: #{tpu_custom_call.1} parent=1 // pred_check
      _
    $region31: #{tpu_custom_call.1} parent=1 // pred_check_branch
      %52 = sbr.rel (0) target = $region33
    $region32: #{tpu_custom_call.1} parent=1 // pred_region
      %s54 = ssub.s32 256, 256
      %55 = vsyncadd [#allocation7], %s54
      %s56 = sshll.u32 [#allocation8], 4
      %s57 = int_to_ptr.vmem [resolvable:$true] %s56
      %62 = dma.hbm_to_vmem [thread:$0]  %s7, 256, %s57, [#allocation7], 64, 64, 4
    $region33: #{tpu_custom_call.1} parent=1 // pred_fallthru
      _
    // Predicated region
    $region34: #{tpu_custom_call.1} parent=1 // pred_check
      _
    $region35: #{tpu_custom_call.1} parent=1 // pred_check_branch
      %64 = sbr.rel (0) target = $region37
    $region36: #{tpu_custom_call.1} parent=1 // pred_region
      _
    $region37: #{tpu_custom_call.1} parent=1 // pred_fallthru
      _
    // Predicated region
    $region38: #{tpu_custom_call.1} parent=1 // pred_check
      _
    $region39: #{tpu_custom_call.1} parent=1 // pred_check_branch
      %66 = sbr.rel (0) target = $region41
    $region40: #{tpu_custom_call.1} parent=1 // pred_region
      _
    $region41: #{tpu_custom_call.1} parent=1 // pred_fallthru
      _
    // Predicated region
    $region42: #{tpu_custom_call.1} parent=1 // pred_check
      _
    $region43: #{tpu_custom_call.1} parent=1 // pred_check_branch
      %68 = sbr.rel (0) target = $region45
    $region44: #{tpu_custom_call.1} parent=1 // pred_region
      _
    $region45: #{tpu_custom_call.1} parent=1 // pred_fallthru
      _
    // Predicated region
    $region46: #{tpu_custom_call.1} parent=1 // pred_check
      _
    $region47: #{tpu_custom_call.1} parent=1 // pred_check_branch
      %70 = sbr.rel (0) target = $region49
    $region48: #{tpu_custom_call.1} parent=1 // pred_region
      %71 = dma.done [#allocation4], 32
    $region49: #{tpu_custom_call.1} parent=1 // pred_fallthru
      _
    // Predicated region
    $region50: #{tpu_custom_call.1} parent=1 // pred_check
      _
    $region51: #{tpu_custom_call.1} parent=1 // pred_check_branch
      %73 = sbr.rel (0) target = $region53
    $region52: #{tpu_custom_call.1} parent=1 // pred_region
      %74 = dma.done [#allocation7], 256
    $region53: #{tpu_custom_call.1} parent=1 // pred_fallthru
      _
    // Predicated region
    $region54: #{tpu_custom_call.1} parent=1 // pred_check
      _
    $region55: #{tpu_custom_call.1} parent=1 // pred_check_branch
      %76 = sbr.rel (0) target = $region57
    $region56: #{tpu_custom_call.1} parent=1 // pred_region
      %77 = dma.done [#allocation7], 256
    $region57: #{tpu_custom_call.1} parent=1 // pred_fallthru
      _
    %v79 = vld [vmem:[%s2] sm:$0x1]
    %v80 = vld [vmem:[%s2 + $0x1] sm:$0x1]
    %v81 = vld [vmem:[%s2 + $0x2] sm:$0x1]
    %v82 = vld [vmem:[%s0] sm:$0xf]
    %v83 = vld [vmem:[%s0 + $0x4] sm:$0xf]
    %v84 = vld [vmem:[%s0 + $0x8] sm:$0xf]
    %v85 = vld [vmem:[%s0 + $0xc] sm:$0xf]
    %v86 = vld [vmem:[%s1] sm:$0xf]
    %v87 = vld [vmem:[%s1 + $0x4] sm:$0xf]
    %v88 = vld [vmem:[%s1 + $0x8] sm:$0xf]
    %v89 = vld [vmem:[%s1 + $0xc] sm:$0xf]
    %v90 = vld [vmem:[%s1 + $0x10] sm:$0xf]
    %v91 = vld [vmem:[%s1 + $0x14] sm:$0xf]
    %v92 = vld [vmem:[%s1 + $0x18] sm:$0xf]
    %v93 = vld [vmem:[%s1 + $0x1c] sm:$0xf]
    %v94 = vlaneseq
    %v95 = vshrl.u32 %v94, 7
    %v96 = vsub.s32 0, %v95
    %v97 = vrot.slane %v79, %v96
    %v102 = vunpack.c.l.b16 %v82
    %v103 = vunpack.c.l.b16 %v83
    %v104 = vunpack.c.l.b16 %v84
    %v105 = vunpack.c.l.b16 %v85
    %v106 = vpack.c.b16 %v103, %v102
    %v107 = vpack.c.b16 %v105, %v104
    %v116 = vunpack.c.l.b16 %v86
    %v117 = vunpack.c.l.b16 %v87
    %v118 = vunpack.c.l.b16 %v88
    %v119 = vunpack.c.l.b16 %v89
    %v120 = vunpack.c.l.b16 %v90
    %v121 = vunpack.c.l.b16 %v91
    %v122 = vunpack.c.l.b16 %v92
    %v123 = vunpack.c.l.b16 %v93
    %v124 = vpack.c.b16 %v117, %v116
    %v125 = vpack.c.b16 %v119, %v118
    %v126 = vpack.c.b16 %v121, %v120
    %v127 = vpack.c.b16 %v123, %v122
    %vm132 = vcmask 523264
    %v134 = vsel %vm132, %v106, 0
    %v137 = vsel %vm132, %v107, 0
    %139 = vmatprep.subr.bf16.mxu0 0
    %140 = vmatpush1.bf16.msra.mxu0 0
    %141 = vmatprep.subr.bf16.mxu0 0
    %142 = vmatpush1.bf16.msra.mxu0 0
    %143 = vmatprep.subr.bf16.mxu0 0
    %144 = vmatpush1.bf16.msra.mxu0 0
    %145 = vmatprep.subr.bf16.mxu0 0
    %146 = vmatpush1.bf16.msra.mxu0 0
    %147 = vmatprep.subr.bf16.mxu0 0
    %148 = vmatpush1.bf16.msra.mxu0 %v127
    %149 = vmatprep.subr.bf16.mxu0 0
    %150 = vmatpush1.bf16.msra.mxu0 %v126
    %151 = vmatprep.subr.bf16.mxu0 0
    %152 = vmatpush1.bf16.msra.mxu0 %v125
    %153 = vmatprep.subr.bf16.mxu0 0
    %154 = vmatpush1.bf16.msra.mxu0 %v124
    %155 = vmatprep.subr.bf16.mxu0 0
    %156 = vmatpush2.bf16.msra.mxu0 0
    %157 = vmatprep.subr.bf16.mxu0 0
    %158 = vmatpush2.bf16.msra.mxu0 0
    %159 = vmatprep.subr.bf16.mxu0 0
    %160 = vmatpush2.bf16.msra.mxu0 0
    %161 = vmatprep.subr.bf16.mxu0 0
    %162 = vmatpush2.bf16.msra.mxu0 0
    %163 = vmatprep.subr.bf16.mxu0 0
    %164 = vmatpush2.bf16.msra.mxu0 0
    %165 = vmatprep.subr.bf16.mxu0 0
    %166 = vmatpush2.bf16.msra.mxu0 0
    %167 = vmatprep.subr.bf16.mxu0 0
    %168 = vmatpush2.bf16.msra.mxu0 0
    %169 = vmatprep.subr.bf16.mxu0 0
    %170 = vmatpush2.bf16.msra.mxu0 0
    %171 = vmatprep.mubr.bf16.mxu0 0
    %172 = vmatmul.mubr.bf16.gmra.mxu0 %v134
    %v173 = vpop.f32.mrf.mxu0
    %v174 = vadd.f32 %v97, %v173
    %v175 = vpop.f32.mrf.mxu0
    %v176 = vpop.f32.mrf.mxu0
    %v177 = vadd.f32 %v97, %v176
    %v178 = vpop.f32.mrf.mxu0
    %179 = vmatprep.mubr.bf16.mxu0 0
    %180 = vmatmul.mubr.bf16.gmra.mxu0 %v137
    %v181 = vpop.f32.mrf.mxu0
    %v182 = vadd.f32 %v97, %v181
    %v183 = vpop.f32.mrf.mxu0
    %v184 = vpop.f32.mrf.mxu0
    %v185 = vadd.f32 %v97, %v184
    %v186 = vpop.f32.mrf.mxu0
    %187 = vdwg.mxu0
    %v188 = vld [vmem:[%s2 + $0x3] sm:$0x1]
    %v189 = vld [vmem:[%s2 + $0x5] sm:$0x1]
    %v190 = vld [vmem:[%s2 + $0x7] sm:$0x1]
    %v191 = vld [vmem:[%s2 + $0x9] sm:$0x1]
    %v192 = vld [vmem:[%s2 + $0xb] sm:$0x1]
    %v193 = vld [vmem:[#allocation3] sm:$0x1]
    %v194 = vld [vmem:[%s3] sm:$0xff]
    %v195 = vld [vmem:[%s3 + $0x8] sm:$0xff]
    %v196 = vld [vmem:[%s4] sm:$0xff]
    %v197 = vld [vmem:[%s4 + $0x8] sm:$0xff]
    %v198 = vld [vmem:[#allocation6] sm:$0xf]
    %v199 = vld [vmem:[#allocation6 + $0x4] sm:$0xf]
    %v200 = vld [vmem:[#allocation8] sm:$0xf]
    %v201 = vld [vmem:[#allocation8 + $0x4] sm:$0xf]
    %v202 = vld [vmem:[%s8] sm:$0xf]
    %v203 = vld [vmem:[%s8 + $0x4] sm:$0xf]
    %v204 = vld [vmem:[%s8 + $0x8] sm:$0xf]
    %v205 = vld [vmem:[%s8 + $0xc] sm:$0xf]
    %v206 = vld [vmem:[%s9] sm:$0xf]
    %v207 = vld [vmem:[%s9 + $0x4] sm:$0xf]
    %v208 = vld [vmem:[%s9 + $0x8] sm:$0xf]
    %v209 = vld [vmem:[%s9 + $0xc] sm:$0xf]
    %v210 = vld [vmem:[%s9 + $0x10] sm:$0xf]
    %v211 = vld [vmem:[%s9 + $0x14] sm:$0xf]
    %v212 = vld [vmem:[%s9 + $0x18] sm:$0xf]
    %v213 = vld [vmem:[%s9 + $0x1c] sm:$0xf]
    %vm214 = vcmask 261120
    %v215 = vsel %vm214, %v174, 0.0
    %216 = vadd.xlane.f32.xlu0 %v215
    %v217 = vpop.xlane.xlu0 %216
    %v218 = vsel %vm214, %v177, 0.0
    %219 = vadd.xlane.f32.xlu0 %v218
    %v220 = vpop.xlane.xlu0 %219
    %v221 = vsel %vm214, %v182, 0.0
    %222 = vadd.xlane.f32.xlu0 %v221
    %v223 = vpop.xlane.xlu0 %222
    %v224 = vsel %vm214, %v185, 0.0
    %225 = vadd.xlane.f32.xlu0 %v224
    %v226 = vpop.xlane.xlu0 %225
    %v227 = vrcp.pop 32.0
    %v228 = vmul.f32 %v217, %v227
    %v229 = vmul.f32 %v220, %v227
    %v230 = vmul.f32 %v223, %v227
    %v231 = vmul.f32 %v226, %v227
    %v232 = vsub.f32 %v174, %v228
    %v233 = vsub.f32 %v177, %v229
    %v234 = vsub.f32 %v182, %v230
    %v235 = vsub.f32 %v185, %v231
    %v236 = vmul.f32 %v232, %v232
    %v237 = vmul.f32 %v233, %v233
    %v238 = vmul.f32 %v234, %v234
    %v239 = vmul.f32 %v235, %v235
    %v240 = vsel %vm214, %v236, 0.0
    %241 = vadd.xlane.f32.xlu0 %v240
    %v242 = vpop.xlane.xlu0 %241
    %v243 = vsel %vm214, %v237, 0.0
    %244 = vadd.xlane.f32.xlu0 %v243
    %v245 = vpop.xlane.xlu0 %244
    %v246 = vsel %vm214, %v238, 0.0
    %247 = vadd.xlane.f32.xlu0 %v246
    %v248 = vpop.xlane.xlu0 %247
    %v249 = vsel %vm214, %v239, 0.0
    %250 = vadd.xlane.f32.xlu0 %v249
    %v251 = vpop.xlane.xlu0 %250
    %v252 = vmul.f32 %v242, %v227
    %v253 = vmul.f32 %v245, %v227
    %v254 = vmul.f32 %v248, %v227
    %v255 = vmul.f32 %v251, %v227
    %v256 = vadd.f32 %v252, 1e-05
    %v257 = vadd.f32 %v253, 1e-05
    %v258 = vadd.f32 %v254, 1e-05
    %v259 = vadd.f32 %v255, 1e-05
    %v260 = vrsqrt.pop %v256
    %v261 = vrsqrt.pop %v257
    %v262 = vrsqrt.pop %v258
    %v263 = vrsqrt.pop %v259
    %v264 = vmul.f32 %v232, %v260
    %v265 = vmul.f32 %v233, %v261
    %v266 = vmul.f32 %v234, %v262
    %v267 = vmul.f32 %v235, %v263
    %v268 = vlaneseq
    %v269 = vshrl.u32 %v268, 7
    %v270 = vsub.s32 0, %v269
    %v271 = vrot.slane %v188, %v270
    %v272 = vmul.f32 %v264, %v271
    %v273 = vmul.f32 %v265, %v271
    %v274 = vmul.f32 %v266, %v271
    %v275 = vmul.f32 %v267, %v271
    %v276 = vlaneseq
    %v277 = vshrl.u32 %v276, 7
    %v278 = vsub.s32 0, %v277
    %v279 = vrot.slane %v189, %v278
    %v280 = vadd.f32 %v272, %v279
    %v281 = vadd.f32 %v273, %v279
    %v282 = vadd.f32 %v274, %v279
    %v283 = vadd.f32 %v275, %v279
    %v284 = vpack.c.bf16 %v281, %v280
    %v287 = vunpack.c.l.b16 %v198
    %v288 = vunpack.c.l.b16 %v199
    %v289 = vpack.c.b16 %v288, %v287
    %vm290 = vcmask 130048
    %v292 = vsel %vm290, %v289, 0
    %294 = vmatprep.subr.bf16.mxu0 0
    %295 = vmatpush1.bf16.msra.mxu0 0
    %296 = vmatprep.subr.bf16.mxu0 0
    %297 = vmatpush1.bf16.msra.mxu0 0
    %298 = vmatprep.subr.bf16.mxu0 0
    %299 = vmatpush1.bf16.msra.mxu0 0
    %300 = vmatprep.subr.bf16.mxu0 0
    %301 = vmatpush1.bf16.msra.mxu0 0
    %302 = vmatprep.subr.bf16.mxu0 0
    %303 = vmatpush1.bf16.msra.mxu0 0
    %304 = vmatprep.subr.bf16.mxu0 0
    %305 = vmatpush1.bf16.msra.mxu0 0
    %306 = vmatprep.subr.bf16.mxu0 0
    %307 = vmatpush1.bf16.msra.mxu0 0
    %308 = vmatprep.subr.bf16.mxu0 0
    %309 = vmatpush1.bf16.msra.mxu0 %v284
    %310 = vmatprep.subr.bf16.mxu0 0
    %311 = vmatpush2.bf16.msra.mxu0 0
    %312 = vmatprep.subr.bf16.mxu0 0
    %313 = vmatpush2.bf16.msra.mxu0 0
    %314 = vmatprep.subr.bf16.mxu0 0
    %315 = vmatpush2.bf16.msra.mxu0 0
    %316 = vmatprep.subr.bf16.mxu0 0
    %317 = vmatpush2.bf16.msra.mxu0 0
    %318 = vmatprep.subr.bf16.mxu0 0
    %319 = vmatpush2.bf16.msra.mxu0 0
    %320 = vmatprep.subr.bf16.mxu0 0
    %321 = vmatpush2.bf16.msra.mxu0 0
    %322 = vmatprep.subr.bf16.mxu0 0
    %323 = vmatpush2.bf16.msra.mxu0 0
    %324 = vmatprep.subr.bf16.mxu0 0
    %325 = vmatpush2.bf16.msra.mxu0 0
    %326 = vmatprep.mubr.bf16.mxu0 0
    %327 = vmatmul.mubr.bf16.gmra.mxu0 %v292
    %v328 = vpop.f32.mrf.mxu0
    %v329 = vadd.f32 %v194, %v328
    %v330 = vpop.f32.mrf.mxu0
    %v331 = vpop.f32.mrf.mxu0
    %v332 = vadd.f32 %v195, %v331
    %v333 = vpop.f32.mrf.mxu0
    %334 = vdwg.mxu0
    %v335 = vmul.f32 %v329, 0.5
    %v336 = vmul.f32 %v332, 0.5
    %v337 = vmul.f32 %v329, 0.70710677
    %v338 = vmul.f32 %v332, 0.70710677
    %v339 = verf.f32.pop %v337
    %v340 = verf.f32.pop %v338
    %v341 = vadd.f32 %v339, 1.0
    %v342 = vadd.f32 %v340, 1.0
    %v343 = vmul.f32 %v335, %v341
    %v344 = vmul.f32 %v336, %v342
    %v345 = vpack.c.bf16 %v344, %v343
    %v348 = vunpack.c.l.b16 %v200
    %v349 = vunpack.c.l.b16 %v201
    %v350 = vpack.c.b16 %v349, %v348
    %v352 = vsel %vm290, %v350, 0
    %354 = vmatprep.subr.bf16.mxu0 0
    %355 = vmatpush1.bf16.msra.mxu0 0
    %356 = vmatprep.subr.bf16.mxu0 0
    %357 = vmatpush1.bf16.msra.mxu0 0
    %358 = vmatprep.subr.bf16.mxu0 0
    %359 = vmatpush1.bf16.msra.mxu0 0
    %360 = vmatprep.subr.bf16.mxu0 0
    %361 = vmatpush1.bf16.msra.mxu0 0
    %362 = vmatprep.subr.bf16.mxu0 0
    %363 = vmatpush1.bf16.msra.mxu0 0
    %364 = vmatprep.subr.bf16.mxu0 0
    %365 = vmatpush1.bf16.msra.mxu0 0
    %366 = vmatprep.subr.bf16.mxu0 0
    %367 = vmatpush1.bf16.msra.mxu0 0
    %368 = vmatprep.subr.bf16.mxu0 0
    %369 = vmatpush1.bf16.msra.mxu0 %v345
    %370 = vmatprep.subr.bf16.mxu0 0
    %371 = vmatpush2.bf16.msra.mxu0 0
    %372 = vmatprep.subr.bf16.mxu0 0
    %373 = vmatpush2.bf16.msra.mxu0 0
    %374 = vmatprep.subr.bf16.mxu0 0
    %375 = vmatpush2.bf16.msra.mxu0 0
    %376 = vmatprep.subr.bf16.mxu0 0
    %377 = vmatpush2.bf16.msra.mxu0 0
    %378 = vmatprep.subr.bf16.mxu0 0
    %379 = vmatpush2.bf16.msra.mxu0 0
    %380 = vmatprep.subr.bf16.mxu0 0
    %381 = vmatpush2.bf16.msra.mxu0 0
    %382 = vmatprep.subr.bf16.mxu0 0
    %383 = vmatpush2.bf16.msra.mxu0 0
    %384 = vmatprep.subr.bf16.mxu0 0
    %385 = vmatpush2.bf16.msra.mxu0 0
    %386 = vmatprep.mubr.bf16.mxu0 0
    %387 = vmatmul.mubr.bf16.gmra.mxu0 %v352
    %v388 = vpop.f32.mrf.mxu0
    %v389 = vadd.f32 %v196, %v388
    %v390 = vpop.f32.mrf.mxu0
    %v391 = vpop.f32.mrf.mxu0
    %v392 = vadd.f32 %v197, %v391
    %v393 = vpop.f32.mrf.mxu0
    %394 = vdwg.mxu0
    %395 = vst.msk [vmem:[#allocation2] sm:$0xff] %vm214, %v389
    %396 = vst.msk [vmem:[#allocation2 + $0x8] sm:$0xff] %vm214, %v392
    %v397 = vpack.c.bf16 %v283, %v282
    %398 = vmatprep.subr.bf16.mxu0 0
    %399 = vmatpush1.bf16.msra.mxu0 0
    %400 = vmatprep.subr.bf16.mxu0 0
    %401 = vmatpush1.bf16.msra.mxu0 0
    %402 = vmatprep.subr.bf16.mxu0 0
    %403 = vmatpush1.bf16.msra.mxu0 0
    %404 = vmatprep.subr.bf16.mxu0 0
    %405 = vmatpush1.bf16.msra.mxu0 0
    %406 = vmatprep.subr.bf16.mxu0 0
    %407 = vmatpush1.bf16.msra.mxu0 0
    %408 = vmatprep.subr.bf16.mxu0 0
    %409 = vmatpush1.bf16.msra.mxu0 0
    %410 = vmatprep.subr.bf16.mxu0 0
    %411 = vmatpush1.bf16.msra.mxu0 0
    %412 = vmatprep.subr.bf16.mxu0 0
    %413 = vmatpush1.bf16.msra.mxu0 %v397
    %414 = vmatprep.subr.bf16.mxu0 0
    %415 = vmatpush2.bf16.msra.mxu0 0
    %416 = vmatprep.subr.bf16.mxu0 0
    %417 = vmatpush2.bf16.msra.mxu0 0
    %418 = vmatprep.subr.bf16.mxu0 0
    %419 = vmatpush2.bf16.msra.mxu0 0
    %420 = vmatprep.subr.bf16.mxu0 0
    %421 = vmatpush2.bf16.msra.mxu0 0
    %422 = vmatprep.subr.bf16.mxu0 0
    %423 = vmatpush2.bf16.msra.mxu0 0
    %424 = vmatprep.subr.bf16.mxu0 0
    %425 = vmatpush2.bf16.msra.mxu0 0
    %426 = vmatprep.subr.bf16.mxu0 0
    %427 = vmatpush2.bf16.msra.mxu0 0
    %428 = vmatprep.subr.bf16.mxu0 0
    %429 = vmatpush2.bf16.msra.mxu0 0
    %430 = vmatprep.mubr.bf16.mxu0 0
    %431 = vmatmul.mubr.bf16.gmra.mxu0 %v292
    %v432 = vpop.f32.mrf.mxu0
    %v433 = vadd.f32 %v194, %v432
    %v434 = vpop.f32.mrf.mxu0
    %v435 = vpop.f32.mrf.mxu0
    %v436 = vadd.f32 %v195, %v435
    %v437 = vpop.f32.mrf.mxu0
    %438 = vdwg.mxu0
    %v439 = vmul.f32 %v433, 0.5
    %v440 = vmul.f32 %v436, 0.5
    %v441 = vmul.f32 %v433, 0.70710677
    %v442 = vmul.f32 %v436, 0.70710677
    %v443 = verf.f32.pop %v441
    %v444 = verf.f32.pop %v442
    %v445 = vadd.f32 %v443, 1.0
    %v446 = vadd.f32 %v444, 1.0
    %v447 = vmul.f32 %v439, %v445
    %v448 = vmul.f32 %v440, %v446
    %v449 = vpack.c.bf16 %v448, %v447
    %450 = vmatprep.subr.bf16.mxu0 0
    %451 = vmatpush1.bf16.msra.mxu0 0
    %452 = vmatprep.subr.bf16.mxu0 0
    %453 = vmatpush1.bf16.msra.mxu0 0
    %454 = vmatprep.subr.bf16.mxu0 0
    %455 = vmatpush1.bf16.msra.mxu0 0
    %456 = vmatprep.subr.bf16.mxu0 0
    %457 = vmatpush1.bf16.msra.mxu0 0
    %458 = vmatprep.subr.bf16.mxu0 0
    %459 = vmatpush1.bf16.msra.mxu0 0
    %460 = vmatprep.subr.bf16.mxu0 0
    %461 = vmatpush1.bf16.msra.mxu0 0
    %462 = vmatprep.subr.bf16.mxu0 0
    %463 = vmatpush1.bf16.msra.mxu0 0
    %464 = vmatprep.subr.bf16.mxu0 0
    %465 = vmatpush1.bf16.msra.mxu0 %v449
    %466 = vmatprep.subr.bf16.mxu0 0
    %467 = vmatpush2.bf16.msra.mxu0 0
    %468 = vmatprep.subr.bf16.mxu0 0
    %469 = vmatpush2.bf16.msra.mxu0 0
    %470 = vmatprep.subr.bf16.mxu0 0
    %471 = vmatpush2.bf16.msra.mxu0 0
    %472 = vmatprep.subr.bf16.mxu0 0
    %473 = vmatpush2.bf16.msra.mxu0 0
    %474 = vmatprep.subr.bf16.mxu0 0
    %475 = vmatpush2.bf16.msra.mxu0 0
    %476 = vmatprep.subr.bf16.mxu0 0
    %477 = vmatpush2.bf16.msra.mxu0 0
    %478 = vmatprep.subr.bf16.mxu0 0
    %479 = vmatpush2.bf16.msra.mxu0 0
    %480 = vmatprep.subr.bf16.mxu0 0
    %481 = vmatpush2.bf16.msra.mxu0 0
    %482 = vmatprep.mubr.bf16.mxu0 0
    %483 = vmatmul.mubr.bf16.gmra.mxu0 %v352
    %v484 = vpop.f32.mrf.mxu0
    %v485 = vadd.f32 %v196, %v484
    %v486 = vpop.f32.mrf.mxu0
    %v487 = vpop.f32.mrf.mxu0
    %v488 = vadd.f32 %v197, %v487
    %v489 = vpop.f32.mrf.mxu0
    %490 = vdwg.mxu0
    %491 = vst.msk [vmem:[#allocation2 + $0x10] sm:$0xff] %vm214, %v485
    %492 = vst.msk [vmem:[#allocation2 + $0x18] sm:$0xff] %vm214, %v488
    %v493 = vld [vmem:[#allocation2] sm:$0xff]
    %v494 = vld [vmem:[#allocation2 + $0x8] sm:$0xff]
    %v495 = vld [vmem:[#allocation2 + $0x10] sm:$0xff]
    %v496 = vld [vmem:[#allocation2 + $0x18] sm:$0xff]
    %v497 = vadd.f32 %v174, %v493
    %v498 = vadd.f32 %v177, %v494
    %v499 = vadd.f32 %v182, %v495
    %v500 = vadd.f32 %v185, %v496
    %v501 = vsel %vm214, %v497, 0.0
    %502 = vadd.xlane.f32.xlu0 %v501
    %v503 = vpop.xlane.xlu0 %502
    %v504 = vsel %vm214, %v498, 0.0
    %505 = vadd.xlane.f32.xlu0 %v504
    %v506 = vpop.xlane.xlu0 %505
    %v507 = vsel %vm214, %v499, 0.0
    %508 = vadd.xlane.f32.xlu0 %v507
    %v509 = vpop.xlane.xlu0 %508
    %v510 = vsel %vm214, %v500, 0.0
    %511 = vadd.xlane.f32.xlu0 %v510
    %v512 = vpop.xlane.xlu0 %511
    %v513 = vmul.f32 %v503, %v227
    %v514 = vmul.f32 %v506, %v227
    %v515 = vmul.f32 %v509, %v227
    %v516 = vmul.f32 %v512, %v227
    %v517 = vsub.f32 %v497, %v513
    %v518 = vsub.f32 %v498, %v514
    %v519 = vsub.f32 %v499, %v515
    %v520 = vsub.f32 %v500, %v516
    %v521 = vmul.f32 %v517, %v517
    %v522 = vmul.f32 %v518, %v518
    %v523 = vmul.f32 %v519, %v519
    %v524 = vmul.f32 %v520, %v520
    %v525 = vsel %vm214, %v521, 0.0
    %526 = vadd.xlane.f32.xlu0 %v525
    %v527 = vpop.xlane.xlu0 %526
    %v528 = vsel %vm214, %v522, 0.0
    %529 = vadd.xlane.f32.xlu0 %v528
    %v530 = vpop.xlane.xlu0 %529
    %v531 = vsel %vm214, %v523, 0.0
    %532 = vadd.xlane.f32.xlu0 %v531
    %v533 = vpop.xlane.xlu0 %532
    %v534 = vsel %vm214, %v524, 0.0
    %535 = vadd.xlane.f32.xlu0 %v534
    %v536 = vpop.xlane.xlu0 %535
    %v537 = vmul.f32 %v527, %v227
    %v538 = vmul.f32 %v530, %v227
    %v539 = vmul.f32 %v533, %v227
    %v540 = vmul.f32 %v536, %v227
    %v541 = vadd.f32 %v537, 1e-05
    %v542 = vadd.f32 %v538, 1e-05
    %v543 = vadd.f32 %v539, 1e-05
    %v544 = vadd.f32 %v540, 1e-05
    %v545 = vrsqrt.pop %v541
    %v546 = vrsqrt.pop %v542
    %v547 = vrsqrt.pop %v543
    %v548 = vrsqrt.pop %v544
    %v549 = vmul.f32 %v517, %v545
    %v550 = vmul.f32 %v518, %v546
    %v551 = vmul.f32 %v519, %v547
    %v552 = vmul.f32 %v520, %v548
    %v553 = vlaneseq
    %v554 = vshrl.u32 %v553, 7
    %v555 = vsub.s32 0, %v554
    %v556 = vrot.slane %v190, %v555
    %v557 = vmul.f32 %v549, %v556
    %v558 = vmul.f32 %v550, %v556
    %v559 = vmul.f32 %v551, %v556
    %v560 = vmul.f32 %v552, %v556
    %v561 = vlaneseq
    %v562 = vshrl.u32 %v561, 7
    %v563 = vsub.s32 0, %v562
    %v564 = vrot.slane %v191, %v563
    %v565 = vadd.f32 %v557, %v564
    %v566 = vadd.f32 %v558, %v564
    %v567 = vadd.f32 %v559, %v564
    %v568 = vadd.f32 %v560, %v564
    %v569 = vpack.c.bf16 %v566, %v565
    %v570 = vpack.c.bf16 %v568, %v567
    %v571 = vlaneseq
    %v572 = vshrl.u32 %v571, 7
    %v573 = vsub.s32 0, %v572
    %v574 = vrot.slane %v193, %v573
    %v579 = vunpack.c.l.b16 %v202
    %v580 = vunpack.c.l.b16 %v203
    %v581 = vunpack.c.l.b16 %v204
    %v582 = vunpack.c.l.b16 %v205
    %v583 = vpack.c.b16 %v580, %v579
    %v584 = vpack.c.b16 %v582, %v581
    %v588 = vsel %vm214, %v569, 0
    %v591 = vsel %vm214, %v570, 0
    %593 = vmatprep.subr.bf16.mxu0 0
    %594 = vmatpush1.bf16.msra.mxu0 0
    %595 = vmatprep.subr.bf16.mxu0 0
    %596 = vmatpush1.bf16.msra.mxu0 0
    %597 = vmatprep.subr.bf16.mxu0 0
    %598 = vmatpush1.bf16.msra.mxu0 0
    %599 = vmatprep.subr.bf16.mxu0 0
    %600 = vmatpush1.bf16.msra.mxu0 0
    %601 = vmatprep.subr.bf16.mxu0 0
    %602 = vmatpush1.bf16.msra.mxu0 0
    %603 = vmatprep.subr.bf16.mxu0 0
    %604 = vmatpush1.bf16.msra.mxu0 0
    %605 = vmatprep.subr.bf16.mxu0 0
    %606 = vmatpush1.bf16.msra.mxu0 %v584
    %607 = vmatprep.subr.bf16.mxu0 0
    %608 = vmatpush1.bf16.msra.mxu0 %v583
    %609 = vmatprep.subr.bf16.mxu0 0
    %610 = vmatpush2.bf16.msra.mxu0 0
    %611 = vmatprep.subr.bf16.mxu0 0
    %612 = vmatpush2.bf16.msra.mxu0 0
    %613 = vmatprep.subr.bf16.mxu0 0
    %614 = vmatpush2.bf16.msra.mxu0 0
    %615 = vmatprep.subr.bf16.mxu0 0
    %616 = vmatpush2.bf16.msra.mxu0 0
    %617 = vmatprep.subr.bf16.mxu0 0
    %618 = vmatpush2.bf16.msra.mxu0 0
    %619 = vmatprep.subr.bf16.mxu0 0
    %620 = vmatpush2.bf16.msra.mxu0 0
    %621 = vmatprep.subr.bf16.mxu0 0
    %622 = vmatpush2.bf16.msra.mxu0 0
    %623 = vmatprep.subr.bf16.mxu0 0
    %624 = vmatpush2.bf16.msra.mxu0 0
    %625 = vmatprep.mubr.bf16.mxu0 0
    %626 = vmatmul.mubr.bf16.gmra.mxu0 %v588
    %v627 = vpop.f32.mrf.mxu0
    %v628 = vadd.f32 %v574, %v627
    %v629 = vpop.f32.mrf.mxu0
    %v630 = vpop.f32.mrf.mxu0
    %v631 = vadd.f32 %v574, %v630
    %v632 = vpop.f32.mrf.mxu0
    %633 = vmatprep.mubr.bf16.mxu0 0
    %634 = vmatmul.mubr.bf16.gmra.mxu0 %v591
    %v635 = vpop.f32.mrf.mxu0
    %v636 = vadd.f32 %v574, %v635
    %v637 = vpop.f32.mrf.mxu0
    %v638 = vpop.f32.mrf.mxu0
    %v639 = vadd.f32 %v574, %v638
    %v640 = vpop.f32.mrf.mxu0
    %641 = vdwg.mxu0
    %v642 = vmul.f32 %v628, 0.5
    %v643 = vmul.f32 %v631, 0.5
    %v644 = vmul.f32 %v636, 0.5
    %v645 = vmul.f32 %v639, 0.5
    %v646 = vmul.f32 %v628, 0.70710677
    %v647 = vmul.f32 %v631, 0.70710677
    %v648 = vmul.f32 %v636, 0.70710677
    %v649 = vmul.f32 %v639, 0.70710677
    %v650 = verf.f32.pop %v646
    %v651 = verf.f32.pop %v647
    %v652 = verf.f32.pop %v648
    %v653 = verf.f32.pop %v649
    %v654 = vadd.f32 %v650, 1.0
    %v655 = vadd.f32 %v651, 1.0
    %v656 = vadd.f32 %v652, 1.0
    %v657 = vadd.f32 %v653, 1.0
    %v658 = vmul.f32 %v642, %v654
    %v659 = vmul.f32 %v643, %v655
    %v660 = vmul.f32 %v644, %v656
    %v661 = vmul.f32 %v645, %v657
    %v662 = vpack.c.bf16 %v659, %v658
    %v663 = vpack.c.bf16 %v661, %v660
    %v664 = vlaneseq
    %v665 = vshrl.u32 %v664, 7
    %v666 = vsub.s32 0, %v665
    %v667 = vrot.slane %v192, %v666
    %v676 = vunpack.c.l.b16 %v206
    %v677 = vunpack.c.l.b16 %v207
    %v678 = vunpack.c.l.b16 %v208
    %v679 = vunpack.c.l.b16 %v209
    %v680 = vunpack.c.l.b16 %v210
    %v681 = vunpack.c.l.b16 %v211
    %v682 = vunpack.c.l.b16 %v212
    %v683 = vunpack.c.l.b16 %v213
    %v684 = vpack.c.b16 %v677, %v676
    %v685 = vpack.c.b16 %v679, %v678
    %v686 = vpack.c.b16 %v681, %v680
    %v687 = vpack.c.b16 %v683, %v682
    %v693 = vsel %vm132, %v662, 0
    %v696 = vsel %vm132, %v663, 0
    %698 = vmatprep.subr.bf16.mxu0 0
    %699 = vmatpush1.bf16.msra.mxu0 0
    %700 = vmatprep.subr.bf16.mxu0 0
    %701 = vmatpush1.bf16.msra.mxu0 0
    %702 = vmatprep.subr.bf16.mxu0 0
    %703 = vmatpush1.bf16.msra.mxu0 0
    %704 = vmatprep.subr.bf16.mxu0 0
    %705 = vmatpush1.bf16.msra.mxu0 0
    %706 = vmatprep.subr.bf16.mxu0 0
    %707 = vmatpush1.bf16.msra.mxu0 %v687
    %708 = vmatprep.subr.bf16.mxu0 0
    %709 = vmatpush1.bf16.msra.mxu0 %v686
    %710 = vmatprep.subr.bf16.mxu0 0
    %711 = vmatpush1.bf16.msra.mxu0 %v685
    %712 = vmatprep.subr.bf16.mxu0 0
    %713 = vmatpush1.bf16.msra.mxu0 %v684
    %714 = vmatprep.subr.bf16.mxu0 0
    %715 = vmatpush2.bf16.msra.mxu0 0
    %716 = vmatprep.subr.bf16.mxu0 0
    %717 = vmatpush2.bf16.msra.mxu0 0
    %718 = vmatprep.subr.bf16.mxu0 0
    %719 = vmatpush2.bf16.msra.mxu0 0
    %720 = vmatprep.subr.bf16.mxu0 0
    %721 = vmatpush2.bf16.msra.mxu0 0
    %722 = vmatprep.subr.bf16.mxu0 0
    %723 = vmatpush2.bf16.msra.mxu0 0
    %724 = vmatprep.subr.bf16.mxu0 0
    %725 = vmatpush2.bf16.msra.mxu0 0
    %726 = vmatprep.subr.bf16.mxu0 0
    %727 = vmatpush2.bf16.msra.mxu0 0
    %728 = vmatprep.subr.bf16.mxu0 0
    %729 = vmatpush2.bf16.msra.mxu0 0
    %730 = vmatprep.mubr.bf16.mxu0 0
    %731 = vmatmul.mubr.bf16.gmra.mxu0 %v693
    %v732 = vpop.f32.mrf.mxu0
    %v733 = vadd.f32 %v667, %v732
    %v734 = vpop.f32.mrf.mxu0
    %v735 = vpop.f32.mrf.mxu0
    %v736 = vadd.f32 %v667, %v735
    %v737 = vpop.f32.mrf.mxu0
    %738 = vmatprep.mubr.bf16.mxu0 0
    %739 = vmatmul.mubr.bf16.gmra.mxu0 %v696
    %v740 = vpop.f32.mrf.mxu0
    %v741 = vadd.f32 %v667, %v740
    %v742 = vpop.f32.mrf.mxu0
    %v743 = vpop.f32.mrf.mxu0
    %v744 = vadd.f32 %v667, %v743
    %v745 = vpop.f32.mrf.mxu0
    %746 = vdwg.mxu0
    %v747 = vadd.f32 %v497, %v733
    %v748 = vadd.f32 %v498, %v736
    %v749 = vadd.f32 %v499, %v741
    %v750 = vadd.f32 %v500, %v744
    %v751 = vld [vmem:[%s2 + $0x4] sm:$0x1]
    %v752 = vld [vmem:[%s2 + $0x6] sm:$0x1]
    %v753 = vld [vmem:[%s2 + $0x8] sm:$0x1]
    %v754 = vld [vmem:[%s2 + $0xa] sm:$0x1]
    %v755 = vld [vmem:[%s2 + $0xc] sm:$0x1]
    %v756 = vld [vmem:[#allocation3 + $0x1] sm:$0x1]
    %s757 = scalar_lea.vmem %s3, 16
    %v758 = vld [vmem:[%s757] sm:$0xff]
    %v759 = vld [vmem:[%s757 + $0x8] sm:$0xff]
    %s760 = scalar_lea.vmem %s4, 16
    %v761 = vld [vmem:[%s760] sm:$0xff]
    %v762 = vld [vmem:[%s760 + $0x8] sm:$0xff]
    %s763 = scalar_lea.vmem [#allocation6], 8
    %v764 = vld [vmem:[%s763] sm:$0xf]
    %v765 = vld [vmem:[%s763 + $0x4] sm:$0xf]
    %s766 = scalar_lea.vmem [#allocation8], 8
    %v767 = vld [vmem:[%s766] sm:$0xf]
    %v768 = vld [vmem:[%s766 + $0x4] sm:$0xf]
    %s769 = scalar_lea.vmem %s8, 16
    %v770 = vld [vmem:[%s769] sm:$0xf]
    %v771 = vld [vmem:[%s769 + $0x4] sm:$0xf]
    %v772 = vld [vmem:[%s769 + $0x8] sm:$0xf]
    %v773 = vld [vmem:[%s769 + $0xc] sm:$0xf]
    %s774 = scalar_lea.vmem %s9, 32
    %v775 = vld [vmem:[%s774] sm:$0xf]
    %v776 = vld [vmem:[%s774 + $0x4] sm:$0xf]
    %v777 = vld [vmem:[%s774 + $0x8] sm:$0xf]
    %v778 = vld [vmem:[%s774 + $0xc] sm:$0xf]
    %v779 = vld [vmem:[%s774 + $0x10] sm:$0xf]
    %v780 = vld [vmem:[%s774 + $0x14] sm:$0xf]
    %v781 = vld [vmem:[%s774 + $0x18] sm:$0xf]
    %v782 = vld [vmem:[%s774 + $0x1c] sm:$0xf]
    %v783 = vsel %vm214, %v747, 0.0
    %784 = vadd.xlane.f32.xlu0 %v783
    %v785 = vpop.xlane.xlu0 %784
    %v786 = vsel %vm214, %v748, 0.0
    %787 = vadd.xlane.f32.xlu0 %v786
    %v788 = vpop.xlane.xlu0 %787
    %v789 = vsel %vm214, %v749, 0.0
    %790 = vadd.xlane.f32.xlu0 %v789
    %v791 = vpop.xlane.xlu0 %790
    %v792 = vsel %vm214, %v750, 0.0
    %793 = vadd.xlane.f32.xlu0 %v792
    %v794 = vpop.xlane.xlu0 %793
    %v795 = vmul.f32 %v785, %v227
    %v796 = vmul.f32 %v788, %v227
    %v797 = vmul.f32 %v791, %v227
    %v798 = vmul.f32 %v794, %v227
    %v799 = vsub.f32 %v747, %v795
    %v800 = vsub.f32 %v748, %v796
    %v801 = vsub.f32 %v749, %v797
    %v802 = vsub.f32 %v750, %v798
    %v803 = vmul.f32 %v799, %v799
    %v804 = vmul.f32 %v800, %v800
    %v805 = vmul.f32 %v801, %v801
    %v806 = vmul.f32 %v802, %v802
    %v807 = vsel %vm214, %v803, 0.0
    %808 = vadd.xlane.f32.xlu0 %v807
    %v809 = vpop.xlane.xlu0 %808
    %v810 = vsel %vm214, %v804, 0.0
    %811 = vadd.xlane.f32.xlu0 %v810
    %v812 = vpop.xlane.xlu0 %811
    %v813 = vsel %vm214, %v805, 0.0
    %814 = vadd.xlane.f32.xlu0 %v813
    %v815 = vpop.xlane.xlu0 %814
    %v816 = vsel %vm214, %v806, 0.0
    %817 = vadd.xlane.f32.xlu0 %v816
    %v818 = vpop.xlane.xlu0 %817
    %v819 = vmul.f32 %v809, %v227
    %v820 = vmul.f32 %v812, %v227
    %v821 = vmul.f32 %v815, %v227
    %v822 = vmul.f32 %v818, %v227
    %v823 = vadd.f32 %v819, 1e-05
    %v824 = vadd.f32 %v820, 1e-05
    %v825 = vadd.f32 %v821, 1e-05
    %v826 = vadd.f32 %v822, 1e-05
    %v827 = vrsqrt.pop %v823
    %v828 = vrsqrt.pop %v824
    %v829 = vrsqrt.pop %v825
    %v830 = vrsqrt.pop %v826
    %v831 = vmul.f32 %v799, %v827
    %v832 = vmul.f32 %v800, %v828
    %v833 = vmul.f32 %v801, %v829
    %v834 = vmul.f32 %v802, %v830
    %v835 = vlaneseq
    %v836 = vshrl.u32 %v835, 7
    %v837 = vsub.s32 0, %v836
    %v838 = vrot.slane %v751, %v837
    %v839 = vmul.f32 %v831, %v838
    %v840 = vmul.f32 %v832, %v838
    %v841 = vmul.f32 %v833, %v838
    %v842 = vmul.f32 %v834, %v838
    %v843 = vlaneseq
    %v844 = vshrl.u32 %v843, 7
    %v845 = vsub.s32 0, %v844
    %v846 = vrot.slane %v752, %v845
    %v847 = vadd.f32 %v839, %v846
    %v848 = vadd.f32 %v840, %v846
    %v849 = vadd.f32 %v841, %v846
    %v850 = vadd.f32 %v842, %v846
    %v851 = vpack.c.bf16 %v848, %v847
    %v854 = vunpack.c.l.b16 %v764
    %v855 = vunpack.c.l.b16 %v765
    %v856 = vpack.c.b16 %v855, %v854
    %v858 = vsel %vm290, %v856, 0
    %860 = vmatprep.subr.bf16.mxu0 0
    %861 = vmatpush1.bf16.msra.mxu0 0
    %862 = vmatprep.subr.bf16.mxu0 0
    %863 = vmatpush1.bf16.msra.mxu0 0
    %864 = vmatprep.subr.bf16.mxu0 0
    %865 = vmatpush1.bf16.msra.mxu0 0
    %866 = vmatprep.subr.bf16.mxu0 0
    %867 = vmatpush1.bf16.msra.mxu0 0
    %868 = vmatprep.subr.bf16.mxu0 0
    %869 = vmatpush1.bf16.msra.mxu0 0
    %870 = vmatprep.subr.bf16.mxu0 0
    %871 = vmatpush1.bf16.msra.mxu0 0
    %872 = vmatprep.subr.bf16.mxu0 0
    %873 = vmatpush1.bf16.msra.mxu0 0
    %874 = vmatprep.subr.bf16.mxu0 0
    %875 = vmatpush1.bf16.msra.mxu0 %v851
    %876 = vmatprep.subr.bf16.mxu0 0
    %877 = vmatpush2.bf16.msra.mxu0 0
    %878 = vmatprep.subr.bf16.mxu0 0
    %879 = vmatpush2.bf16.msra.mxu0 0
    %880 = vmatprep.subr.bf16.mxu0 0
    %881 = vmatpush2.bf16.msra.mxu0 0
    %882 = vmatprep.subr.bf16.mxu0 0
    %883 = vmatpush2.bf16.msra.mxu0 0
    %884 = vmatprep.subr.bf16.mxu0 0
    %885 = vmatpush2.bf16.msra.mxu0 0
    %886 = vmatprep.subr.bf16.mxu0 0
    %887 = vmatpush2.bf16.msra.mxu0 0
    %888 = vmatprep.subr.bf16.mxu0 0
    %889 = vmatpush2.bf16.msra.mxu0 0
    %890 = vmatprep.subr.bf16.mxu0 0
    %891 = vmatpush2.bf16.msra.mxu0 0
    %892 = vmatprep.mubr.bf16.mxu0 0
    %893 = vmatmul.mubr.bf16.gmra.mxu0 %v858
    %v894 = vpop.f32.mrf.mxu0
    %v895 = vadd.f32 %v758, %v894
    %v896 = vpop.f32.mrf.mxu0
    %v897 = vpop.f32.mrf.mxu0
    %v898 = vadd.f32 %v759, %v897
    %v899 = vpop.f32.mrf.mxu0
    %900 = vdwg.mxu0
    %v901 = vmul.f32 %v895, 0.5
    %v902 = vmul.f32 %v898, 0.5
    %v903 = vmul.f32 %v895, 0.70710677
    %v904 = vmul.f32 %v898, 0.70710677
    %v905 = verf.f32.pop %v903
    %v906 = verf.f32.pop %v904
    %v907 = vadd.f32 %v905, 1.0
    %v908 = vadd.f32 %v906, 1.0
    %v909 = vmul.f32 %v901, %v907
    %v910 = vmul.f32 %v902, %v908
    %v911 = vpack.c.bf16 %v910, %v909
    %v914 = vunpack.c.l.b16 %v767
    %v915 = vunpack.c.l.b16 %v768
    %v916 = vpack.c.b16 %v915, %v914
    %v918 = vsel %vm290, %v916, 0
    %920 = vmatprep.subr.bf16.mxu0 0
    %921 = vmatpush1.bf16.msra.mxu0 0
    %922 = vmatprep.subr.bf16.mxu0 0
    %923 = vmatpush1.bf16.msra.mxu0 0
    %924 = vmatprep.subr.bf16.mxu0 0
    %925 = vmatpush1.bf16.msra.mxu0 0
    %926 = vmatprep.subr.bf16.mxu0 0
    %927 = vmatpush1.bf16.msra.mxu0 0
    %928 = vmatprep.subr.bf16.mxu0 0
    %929 = vmatpush1.bf16.msra.mxu0 0
    %930 = vmatprep.subr.bf16.mxu0 0
    %931 = vmatpush1.bf16.msra.mxu0 0
    %932 = vmatprep.subr.bf16.mxu0 0
    %933 = vmatpush1.bf16.msra.mxu0 0
    %934 = vmatprep.subr.bf16.mxu0 0
    %935 = vmatpush1.bf16.msra.mxu0 %v911
    %936 = vmatprep.subr.bf16.mxu0 0
    %937 = vmatpush2.bf16.msra.mxu0 0
    %938 = vmatprep.subr.bf16.mxu0 0
    %939 = vmatpush2.bf16.msra.mxu0 0
    %940 = vmatprep.subr.bf16.mxu0 0
    %941 = vmatpush2.bf16.msra.mxu0 0
    %942 = vmatprep.subr.bf16.mxu0 0
    %943 = vmatpush2.bf16.msra.mxu0 0
    %944 = vmatprep.subr.bf16.mxu0 0
    %945 = vmatpush2.bf16.msra.mxu0 0
    %946 = vmatprep.subr.bf16.mxu0 0
    %947 = vmatpush2.bf16.msra.mxu0 0
    %948 = vmatprep.subr.bf16.mxu0 0
    %949 = vmatpush2.bf16.msra.mxu0 0
    %950 = vmatprep.subr.bf16.mxu0 0
    %951 = vmatpush2.bf16.msra.mxu0 0
    %952 = vmatprep.mubr.bf16.mxu0 0
    %953 = vmatmul.mubr.bf16.gmra.mxu0 %v918
    %v954 = vpop.f32.mrf.mxu0
    %v955 = vadd.f32 %v761, %v954
    %v956 = vpop.f32.mrf.mxu0
    %v957 = vpop.f32.mrf.mxu0
    %v958 = vadd.f32 %v762, %v957
    %v959 = vpop.f32.mrf.mxu0
    %960 = vdwg.mxu0
    %961 = vst.msk [vmem:[#allocation2] sm:$0xff] %vm214, %v955
    %962 = vst.msk [vmem:[#allocation2 + $0x8] sm:$0xff] %vm214, %v958
    %v963 = vpack.c.bf16 %v850, %v849
    %964 = vmatprep.subr.bf16.mxu0 0
    %965 = vmatpush1.bf16.msra.mxu0 0
    %966 = vmatprep.subr.bf16.mxu0 0
    %967 = vmatpush1.bf16.msra.mxu0 0
    %968 = vmatprep.subr.bf16.mxu0 0
    %969 = vmatpush1.bf16.msra.mxu0 0
    %970 = vmatprep.subr.bf16.mxu0 0
    %971 = vmatpush1.bf16.msra.mxu0 0
    %972 = vmatprep.subr.bf16.mxu0 0
    %973 = vmatpush1.bf16.msra.mxu0 0
    %974 = vmatprep.subr.bf16.mxu0 0
    %975 = vmatpush1.bf16.msra.mxu0 0
    %976 = vmatprep.subr.bf16.mxu0 0
    %977 = vmatpush1.bf16.msra.mxu0 0
    %978 = vmatprep.subr.bf16.mxu0 0
    %979 = vmatpush1.bf16.msra.mxu0 %v963
    %980 = vmatprep.subr.bf16.mxu0 0
    %981 = vmatpush2.bf16.msra.mxu0 0
    %982 = vmatprep.subr.bf16.mxu0 0
    %983 = vmatpush2.bf16.msra.mxu0 0
    %984 = vmatprep.subr.bf16.mxu0 0
    %985 = vmatpush2.bf16.msra.mxu0 0
    %986 = vmatprep.subr.bf16.mxu0 0
    %987 = vmatpush2.bf16.msra.mxu0 0
    %988 = vmatprep.subr.bf16.mxu0 0
    %989 = vmatpush2.bf16.msra.mxu0 0
    %990 = vmatprep.subr.bf16.mxu0 0
    %991 = vmatpush2.bf16.msra.mxu0 0
    %992 = vmatprep.subr.bf16.mxu0 0
    %993 = vmatpush2.bf16.msra.mxu0 0
    %994 = vmatprep.subr.bf16.mxu0 0
    %995 = vmatpush2.bf16.msra.mxu0 0
    %996 = vmatprep.mubr.bf16.mxu0 0
    %997 = vmatmul.mubr.bf16.gmra.mxu0 %v858
    %v998 = vpop.f32.mrf.mxu0
    %v999 = vadd.f32 %v758, %v998
    %v1000 = vpop.f32.mrf.mxu0
    %v1001 = vpop.f32.mrf.mxu0
    %v1002 = vadd.f32 %v759, %v1001
    %v1003 = vpop.f32.mrf.mxu0
    %1004 = vdwg.mxu0
    %v1005 = vmul.f32 %v999, 0.5
    %v1006 = vmul.f32 %v1002, 0.5
    %v1007 = vmul.f32 %v999, 0.70710677
    %v1008 = vmul.f32 %v1002, 0.70710677
    %v1009 = verf.f32.pop %v1007
    %v1010 = verf.f32.pop %v1008
    %v1011 = vadd.f32 %v1009, 1.0
    %v1012 = vadd.f32 %v1010, 1.0
    %v1013 = vmul.f32 %v1005, %v1011
    %v1014 = vmul.f32 %v1006, %v1012
    %v1015 = vpack.c.bf16 %v1014, %v1013
    %1016 = vmatprep.subr.bf16.mxu0 0
    %1017 = vmatpush1.bf16.msra.mxu0 0
    %1018 = vmatprep.subr.bf16.mxu0 0
    %1019 = vmatpush1.bf16.msra.mxu0 0
    %1020 = vmatprep.subr.bf16.mxu0 0
    %1021 = vmatpush1.bf16.msra.mxu0 0
    %1022 = vmatprep.subr.bf16.mxu0 0
    %1023 = vmatpush1.bf16.msra.mxu0 0
    %1024 = vmatprep.subr.bf16.mxu0 0
    %1025 = vmatpush1.bf16.msra.mxu0 0
    %1026 = vmatprep.subr.bf16.mxu0 0
    %1027 = vmatpush1.bf16.msra.mxu0 0
    %1028 = vmatprep.subr.bf16.mxu0 0
    %1029 = vmatpush1.bf16.msra.mxu0 0
    %1030 = vmatprep.subr.bf16.mxu0 0
    %1031 = vmatpush1.bf16.msra.mxu0 %v1015
    %1032 = vmatprep.subr.bf16.mxu0 0
    %1033 = vmatpush2.bf16.msra.mxu0 0
    %1034 = vmatprep.subr.bf16.mxu0 0
    %1035 = vmatpush2.bf16.msra.mxu0 0
    %1036 = vmatprep.subr.bf16.mxu0 0
    %1037 = vmatpush2.bf16.msra.mxu0 0
    %1038 = vmatprep.subr.bf16.mxu0 0
    %1039 = vmatpush2.bf16.msra.mxu0 0
    %1040 = vmatprep.subr.bf16.mxu0 0
    %1041 = vmatpush2.bf16.msra.mxu0 0
    %1042 = vmatprep.subr.bf16.mxu0 0
    %1043 = vmatpush2.bf16.msra.mxu0 0
    %1044 = vmatprep.subr.bf16.mxu0 0
    %1045 = vmatpush2.bf16.msra.mxu0 0
    %1046 = vmatprep.subr.bf16.mxu0 0
    %1047 = vmatpush2.bf16.msra.mxu0 0
    %1048 = vmatprep.mubr.bf16.mxu0 0
    %1049 = vmatmul.mubr.bf16.gmra.mxu0 %v918
    %v1050 = vpop.f32.mrf.mxu0
    %v1051 = vadd.f32 %v761, %v1050
    %v1052 = vpop.f32.mrf.mxu0
    %v1053 = vpop.f32.mrf.mxu0
    %v1054 = vadd.f32 %v762, %v1053
    %v1055 = vpop.f32.mrf.mxu0
    %1056 = vdwg.mxu0
    %1057 = vst.msk [vmem:[#allocation2 + $0x10] sm:$0xff] %vm214, %v1051
    %1058 = vst.msk [vmem:[#allocation2 + $0x18] sm:$0xff] %vm214, %v1054
    %v1059 = vld [vmem:[#allocation2] sm:$0xff]
    %v1060 = vld [vmem:[#allocation2 + $0x8] sm:$0xff]
    %v1061 = vld [vmem:[#allocation2 + $0x10] sm:$0xff]
    %v1062 = vld [vmem:[#allocation2 + $0x18] sm:$0xff]
    %v1063 = vadd.f32 %v747, %v1059
    %v1064 = vadd.f32 %v748, %v1060
    %v1065 = vadd.f32 %v749, %v1061
    %v1066 = vadd.f32 %v750, %v1062
    %v1067 = vsel %vm214, %v1063, 0.0
    %1068 = vadd.xlane.f32.xlu0 %v1067
    %v1069 = vpop.xlane.xlu0 %1068
    %v1070 = vsel %vm214, %v1064, 0.0
    %1071 = vadd.xlane.f32.xlu0 %v1070
    %v1072 = vpop.xlane.xlu0 %1071
    %v1073 = vsel %vm214, %v1065, 0.0
    %1074 = vadd.xlane.f32.xlu0 %v1073
    %v1075 = vpop.xlane.xlu0 %1074
    %v1076 = vsel %vm214, %v1066, 0.0
    %1077 = vadd.xlane.f32.xlu0 %v1076
    %v1078 = vpop.xlane.xlu0 %1077
    %v1079 = vmul.f32 %v1069, %v227
    %v1080 = vmul.f32 %v1072, %v227
    %v1081 = vmul.f32 %v1075, %v227
    %v1082 = vmul.f32 %v1078, %v227
    %v1083 = vsub.f32 %v1063, %v1079
    %v1084 = vsub.f32 %v1064, %v1080
    %v1085 = vsub.f32 %v1065, %v1081
    %v1086 = vsub.f32 %v1066, %v1082
    %v1087 = vmul.f32 %v1083, %v1083
    %v1088 = vmul.f32 %v1084, %v1084
    %v1089 = vmul.f32 %v1085, %v1085
    %v1090 = vmul.f32 %v1086, %v1086
    %v1091 = vsel %vm214, %v1087, 0.0
    %1092 = vadd.xlane.f32.xlu0 %v1091
    %v1093 = vpop.xlane.xlu0 %1092
    %v1094 = vsel %vm214, %v1088, 0.0
    %1095 = vadd.xlane.f32.xlu0 %v1094
    %v1096 = vpop.xlane.xlu0 %1095
    %v1097 = vsel %vm214, %v1089, 0.0
    %1098 = vadd.xlane.f32.xlu0 %v1097
    %v1099 = vpop.xlane.xlu0 %1098
    %v1100 = vsel %vm214, %v1090, 0.0
    %1101 = vadd.xlane.f32.xlu0 %v1100
    %v1102 = vpop.xlane.xlu0 %1101
    %v1103 = vmul.f32 %v1093, %v227
    %v1104 = vmul.f32 %v1096, %v227
    %v1105 = vmul.f32 %v1099, %v227
    %v1106 = vmul.f32 %v1102, %v227
    %v1107 = vadd.f32 %v1103, 1e-05
    %v1108 = vadd.f32 %v1104, 1e-05
    %v1109 = vadd.f32 %v1105, 1e-05
    %v1110 = vadd.f32 %v1106, 1e-05
    %v1111 = vrsqrt.pop %v1107
    %v1112 = vrsqrt.pop %v1108
    %v1113 = vrsqrt.pop %v1109
    %v1114 = vrsqrt.pop %v1110
    %v1115 = vmul.f32 %v1083, %v1111
    %v1116 = vmul.f32 %v1084, %v1112
    %v1117 = vmul.f32 %v1085, %v1113
    %v1118 = vmul.f32 %v1086, %v1114
    %v1119 = vlaneseq
    %v1120 = vshrl.u32 %v1119, 7
    %v1121 = vsub.s32 0, %v1120
    %v1122 = vrot.slane %v753, %v1121
    %v1123 = vmul.f32 %v1115, %v1122
    %v1124 = vmul.f32 %v1116, %v1122
    %v1125 = vmul.f32 %v1117, %v1122
    %v1126 = vmul.f32 %v1118, %v1122
    %v1127 = vlaneseq
    %v1128 = vshrl.u32 %v1127, 7
    %v1129 = vsub.s32 0, %v1128
    %v1130 = vrot.slane %v754, %v1129
    %v1131 = vadd.f32 %v1123, %v1130
    %v1132 = vadd.f32 %v1124, %v1130
    %v1133 = vadd.f32 %v1125, %v1130
    %v1134 = vadd.f32 %v1126, %v1130
    %v1135 = vpack.c.bf16 %v1132, %v1131
    %v1136 = vpack.c.bf16 %v1134, %v1133
    %v1137 = vlaneseq
    %v1138 = vshrl.u32 %v1137, 7
    %v1139 = vsub.s32 0, %v1138
    %v1140 = vrot.slane %v756, %v1139
    %v1145 = vunpack.c.l.b16 %v770
    %v1146 = vunpack.c.l.b16 %v771
    %v1147 = vunpack.c.l.b16 %v772
    %v1148 = vunpack.c.l.b16 %v773
    %v1149 = vpack.c.b16 %v1146, %v1145
    %v1150 = vpack.c.b16 %v1148, %v1147
    %v1154 = vsel %vm214, %v1135, 0
    %v1157 = vsel %vm214, %v1136, 0
    %1159 = vmatprep.subr.bf16.mxu0 0
    %1160 = vmatpush1.bf16.msra.mxu0 0
    %1161 = vmatprep.subr.bf16.mxu0 0
    %1162 = vmatpush1.bf16.msra.mxu0 0
    %1163 = vmatprep.subr.bf16.mxu0 0
    %1164 = vmatpush1.bf16.msra.mxu0 0
    %1165 = vmatprep.subr.bf16.mxu0 0
    %1166 = vmatpush1.bf16.msra.mxu0 0
    %1167 = vmatprep.subr.bf16.mxu0 0
    %1168 = vmatpush1.bf16.msra.mxu0 0
    %1169 = vmatprep.subr.bf16.mxu0 0
    %1170 = vmatpush1.bf16.msra.mxu0 0
    %1171 = vmatprep.subr.bf16.mxu0 0
    %1172 = vmatpush1.bf16.msra.mxu0 %v1150
    %1173 = vmatprep.subr.bf16.mxu0 0
    %1174 = vmatpush1.bf16.msra.mxu0 %v1149
    %1175 = vmatprep.subr.bf16.mxu0 0
    %1176 = vmatpush2.bf16.msra.mxu0 0
    %1177 = vmatprep.subr.bf16.mxu0 0
    %1178 = vmatpush2.bf16.msra.mxu0 0
    %1179 = vmatprep.subr.bf16.mxu0 0
    %1180 = vmatpush2.bf16.msra.mxu0 0
    %1181 = vmatprep.subr.bf16.mxu0 0
    %1182 = vmatpush2.bf16.msra.mxu0 0
    %1183 = vmatprep.subr.bf16.mxu0 0
    %1184 = vmatpush2.bf16.msra.mxu0 0
    %1185 = vmatprep.subr.bf16.mxu0 0
    %1186 = vmatpush2.bf16.msra.mxu0 0
    %1187 = vmatprep.subr.bf16.mxu0 0
    %1188 = vmatpush2.bf16.msra.mxu0 0
    %1189 = vmatprep.subr.bf16.mxu0 0
    %1190 = vmatpush2.bf16.msra.mxu0 0
    %1191 = vmatprep.mubr.bf16.mxu0 0
    %1192 = vmatmul.mubr.bf16.gmra.mxu0 %v1154
    %v1193 = vpop.f32.mrf.mxu0
    %v1194 = vadd.f32 %v1140, %v1193
    %v1195 = vpop.f32.mrf.mxu0
    %v1196 = vpop.f32.mrf.mxu0
    %v1197 = vadd.f32 %v1140, %v1196
    %v1198 = vpop.f32.mrf.mxu0
    %1199 = vmatprep.mubr.bf16.mxu0 0
    %1200 = vmatmul.mubr.bf16.gmra.mxu0 %v1157
    %v1201 = vpop.f32.mrf.mxu0
    %v1202 = vadd.f32 %v1140, %v1201
    %v1203 = vpop.f32.mrf.mxu0
    %v1204 = vpop.f32.mrf.mxu0
    %v1205 = vadd.f32 %v1140, %v1204
    %v1206 = vpop.f32.mrf.mxu0
    %1207 = vdwg.mxu0
    %v1208 = vmul.f32 %v1194, 0.5
    %v1209 = vmul.f32 %v1197, 0.5
    %v1210 = vmul.f32 %v1202, 0.5
    %v1211 = vmul.f32 %v1205, 0.5
    %v1212 = vmul.f32 %v1194, 0.70710677
    %v1213 = vmul.f32 %v1197, 0.70710677
    %v1214 = vmul.f32 %v1202, 0.70710677
    %v1215 = vmul.f32 %v1205, 0.70710677
    %v1216 = verf.f32.pop %v1212
    %v1217 = verf.f32.pop %v1213
    %v1218 = verf.f32.pop %v1214
    %v1219 = verf.f32.pop %v1215
    %v1220 = vadd.f32 %v1216, 1.0
    %v1221 = vadd.f32 %v1217, 1.0
    %v1222 = vadd.f32 %v1218, 1.0
    %v1223 = vadd.f32 %v1219, 1.0
    %v1224 = vmul.f32 %v1208, %v1220
    %v1225 = vmul.f32 %v1209, %v1221
    %v1226 = vmul.f32 %v1210, %v1222
    %v1227 = vmul.f32 %v1211, %v1223
    %v1228 = vpack.c.bf16 %v1225, %v1224
    %v1229 = vpack.c.bf16 %v1227, %v1226
    %v1230 = vlaneseq
    %v1231 = vshrl.u32 %v1230, 7
    %v1232 = vsub.s32 0, %v1231
    %v1233 = vrot.slane %v755, %v1232
    %v1242 = vunpack.c.l.b16 %v775
    %v1243 = vunpack.c.l.b16 %v776
    %v1244 = vunpack.c.l.b16 %v777
    %v1245 = vunpack.c.l.b16 %v778
    %v1246 = vunpack.c.l.b16 %v779
    %v1247 = vunpack.c.l.b16 %v780
    %v1248 = vunpack.c.l.b16 %v781
    %v1249 = vunpack.c.l.b16 %v782
    %v1250 = vpack.c.b16 %v1243, %v1242
    %v1251 = vpack.c.b16 %v1245, %v1244
    %v1252 = vpack.c.b16 %v1247, %v1246
    %v1253 = vpack.c.b16 %v1249, %v1248
    %v1259 = vsel %vm132, %v1228, 0
    %v1262 = vsel %vm132, %v1229, 0
    %1264 = vmatprep.subr.bf16.mxu0 0
    %1265 = vmatpush1.bf16.msra.mxu0 0
    %1266 = vmatprep.subr.bf16.mxu0 0
    %1267 = vmatpush1.bf16.msra.mxu0 0
    %1268 = vmatprep.subr.bf16.mxu0 0
    %1269 = vmatpush1.bf16.msra.mxu0 0
    %1270 = vmatprep.subr.bf16.mxu0 0
    %1271 = vmatpush1.bf16.msra.mxu0 0
    %1272 = vmatprep.subr.bf16.mxu0 0
    %1273 = vmatpush1.bf16.msra.mxu0 %v1253
    %1274 = vmatprep.subr.bf16.mxu0 0
    %1275 = vmatpush1.bf16.msra.mxu0 %v1252
    %1276 = vmatprep.subr.bf16.mxu0 0
    %1277 = vmatpush1.bf16.msra.mxu0 %v1251
    %1278 = vmatprep.subr.bf16.mxu0 0
    %1279 = vmatpush1.bf16.msra.mxu0 %v1250
    %1280 = vmatprep.subr.bf16.mxu0 0
    %1281 = vmatpush2.bf16.msra.mxu0 0
    %1282 = vmatprep.subr.bf16.mxu0 0
    %1283 = vmatpush2.bf16.msra.mxu0 0
    %1284 = vmatprep.subr.bf16.mxu0 0
    %1285 = vmatpush2.bf16.msra.mxu0 0
    %1286 = vmatprep.subr.bf16.mxu0 0
    %1287 = vmatpush2.bf16.msra.mxu0 0
    %1288 = vmatprep.subr.bf16.mxu0 0
    %1289 = vmatpush2.bf16.msra.mxu0 0
    %1290 = vmatprep.subr.bf16.mxu0 0
    %1291 = vmatpush2.bf16.msra.mxu0 0
    %1292 = vmatprep.subr.bf16.mxu0 0
    %1293 = vmatpush2.bf16.msra.mxu0 0
    %1294 = vmatprep.subr.bf16.mxu0 0
    %1295 = vmatpush2.bf16.msra.mxu0 0
    %1296 = vmatprep.mubr.bf16.mxu0 0
    %1297 = vmatmul.mubr.bf16.gmra.mxu0 %v1259
    %v1298 = vpop.f32.mrf.mxu0
    %v1299 = vadd.f32 %v1233, %v1298
    %v1300 = vpop.f32.mrf.mxu0
    %v1301 = vpop.f32.mrf.mxu0
    %v1302 = vadd.f32 %v1233, %v1301
    %v1303 = vpop.f32.mrf.mxu0
    %1304 = vmatprep.mubr.bf16.mxu0 0
    %1305 = vmatmul.mubr.bf16.gmra.mxu0 %v1262
    %v1306 = vpop.f32.mrf.mxu0
    %v1307 = vadd.f32 %v1233, %v1306
    %v1308 = vpop.f32.mrf.mxu0
    %v1309 = vpop.f32.mrf.mxu0
    %v1310 = vadd.f32 %v1233, %v1309
    %v1311 = vpop.f32.mrf.mxu0
    %1312 = vdwg.mxu0
    %v1313 = vadd.f32 %v1063, %v1299
    %v1314 = vadd.f32 %v1064, %v1302
    %v1315 = vadd.f32 %v1065, %v1307
    %v1316 = vadd.f32 %v1066, %v1310
    %v1317 = vsel %vm214, %v1313, 0.0
    %1318 = vadd.xlane.f32.xlu0 %v1317
    %v1319 = vpop.xlane.xlu0 %1318
    %v1320 = vsel %vm214, %v1314, 0.0
    %1321 = vadd.xlane.f32.xlu0 %v1320
    %v1322 = vpop.xlane.xlu0 %1321
    %v1323 = vsel %vm214, %v1315, 0.0
    %1324 = vadd.xlane.f32.xlu0 %v1323
    %v1325 = vpop.xlane.xlu0 %1324
    %v1326 = vsel %vm214, %v1316, 0.0
    %1327 = vadd.xlane.f32.xlu0 %v1326
    %v1328 = vpop.xlane.xlu0 %1327
    %v1329 = vmul.f32 %v1319, %v227
    %v1330 = vmul.f32 %v1322, %v227
    %v1331 = vmul.f32 %v1325, %v227
    %v1332 = vmul.f32 %v1328, %v227
    %v1333 = vsub.f32 %v1313, %v1329
    %v1334 = vsub.f32 %v1314, %v1330
    %v1335 = vsub.f32 %v1315, %v1331
    %v1336 = vsub.f32 %v1316, %v1332
    %v1337 = vmul.f32 %v1333, %v1333
    %v1338 = vmul.f32 %v1334, %v1334
    %v1339 = vmul.f32 %v1335, %v1335
    %v1340 = vmul.f32 %v1336, %v1336
    %v1341 = vsel %vm214, %v1337, 0.0
    %1342 = vadd.xlane.f32.xlu0 %v1341
    %v1343 = vpop.xlane.xlu0 %1342
    %v1344 = vsel %vm214, %v1338, 0.0
    %1345 = vadd.xlane.f32.xlu0 %v1344
    %v1346 = vpop.xlane.xlu0 %1345
    %v1347 = vsel %vm214, %v1339, 0.0
    %1348 = vadd.xlane.f32.xlu0 %v1347
    %v1349 = vpop.xlane.xlu0 %1348
    %v1350 = vsel %vm214, %v1340, 0.0
    %1351 = vadd.xlane.f32.xlu0 %v1350
    %v1352 = vpop.xlane.xlu0 %1351
    %v1353 = vmul.f32 %v1343, %v227
    %v1354 = vmul.f32 %v1346, %v227
    %v1355 = vmul.f32 %v1349, %v227
    %v1356 = vmul.f32 %v1352, %v227
    %v1357 = vadd.f32 %v1353, 1e-05
    %v1358 = vadd.f32 %v1354, 1e-05
    %v1359 = vadd.f32 %v1355, 1e-05
    %v1360 = vadd.f32 %v1356, 1e-05
    %v1361 = vrsqrt.pop %v1357
    %v1362 = vrsqrt.pop %v1358
    %v1363 = vrsqrt.pop %v1359
    %v1364 = vrsqrt.pop %v1360
    %v1365 = vmul.f32 %v1333, %v1361
    %v1366 = vmul.f32 %v1334, %v1362
    %v1367 = vmul.f32 %v1335, %v1363
    %v1368 = vmul.f32 %v1336, %v1364
    %v1369 = vlaneseq
    %v1370 = vshrl.u32 %v1369, 7
    %v1371 = vsub.s32 0, %v1370
    %v1372 = vrot.slane %v80, %v1371
    %v1373 = vmul.f32 %v1365, %v1372
    %v1374 = vmul.f32 %v1366, %v1372
    %v1375 = vmul.f32 %v1367, %v1372
    %v1376 = vmul.f32 %v1368, %v1372
    %v1377 = vlaneseq
    %v1378 = vshrl.u32 %v1377, 7
    %v1379 = vsub.s32 0, %v1378
    %v1380 = vrot.slane %v81, %v1379
    %v1381 = vadd.f32 %v1373, %v1380
    %v1382 = vadd.f32 %v1374, %v1380
    %v1383 = vadd.f32 %v1375, %v1380
    %v1384 = vadd.f32 %v1376, %v1380
    %v1385 = vld [vmem:[%s10] sm:$0x3]
    %v1387 = vsel %vm214, %v1385, 0
    %1389 = vmatprep.subr.mxu0 0.0
    %1390 = vmatpush1.msra.mxu0 0.0
    %1391 = vmatprep.subr.mxu0 0.0
    %1392 = vmatpush1.msra.mxu0 0.0
    %1393 = vmatprep.subr.mxu0 0.0
    %1394 = vmatpush1.msra.mxu0 0.0
    %1395 = vmatprep.subr.mxu0 0.0
    %1396 = vmatpush1.msra.mxu0 0.0
    %1397 = vmatprep.subr.mxu0 0.0
    %1398 = vmatpush1.msra.mxu0 0.0
    %1399 = vmatprep.subr.mxu0 0.0
    %1400 = vmatpush1.msra.mxu0 0.0
    %1401 = vmatprep.subr.mxu0 0.0
    %1402 = vmatpush1.msra.mxu0 0.0
    %1403 = vmatprep.subr.mxu0 0.0
    %1404 = vmatpush1.msra.mxu0 0.0
    %1405 = vmatprep.subr.mxu0 0.0
    %1406 = vmatpush1.msra.mxu0 0.0
    %1407 = vmatprep.subr.mxu0 0.0
    %1408 = vmatpush1.msra.mxu0 0.0
    %1409 = vmatprep.subr.mxu0 0.0
    %1410 = vmatpush1.msra.mxu0 0.0
    %1411 = vmatprep.subr.mxu0 0.0
    %1412 = vmatpush1.msra.mxu0 0.0
    %1413 = vmatprep.subr.mxu0 0.0
    %1414 = vmatpush1.msra.mxu0 %v1384
    %1415 = vmatprep.subr.mxu0 0.0
    %1416 = vmatpush1.msra.mxu0 %v1383
    %1417 = vmatprep.subr.mxu0 0.0
    %1418 = vmatpush1.msra.mxu0 %v1382
    %1419 = vmatprep.subr.mxu0 0.0
    %1420 = vmatpush1.msra.mxu0 %v1381
    %1421 = vmatprep.subr.mxu0 0.0
    %1422 = vmatpush2.msra.mxu0 0.0
    %1423 = vmatprep.subr.mxu0 0.0
    %1424 = vmatpush2.msra.mxu0 0.0
    %1425 = vmatprep.subr.mxu0 0.0
    %1426 = vmatpush2.msra.mxu0 0.0
    %1427 = vmatprep.subr.mxu0 0.0
    %1428 = vmatpush2.msra.mxu0 0.0
    %1429 = vmatprep.subr.mxu0 0.0
    %1430 = vmatpush2.msra.mxu0 0.0
    %1431 = vmatprep.subr.mxu0 0.0
    %1432 = vmatpush2.msra.mxu0 0.0
    %1433 = vmatprep.subr.mxu0 0.0
    %1434 = vmatpush2.msra.mxu0 0.0
    %1435 = vmatprep.subr.mxu0 0.0
    %1436 = vmatpush2.msra.mxu0 0.0
    %1437 = vmatprep.subr.mxu0 0.0
    %1438 = vmatpush2.msra.mxu0 0.0
    %1439 = vmatprep.subr.mxu0 0.0
    %1440 = vmatpush2.msra.mxu0 0.0
    %1441 = vmatprep.subr.mxu0 0.0
    %1442 = vmatpush2.msra.mxu0 0.0
    %1443 = vmatprep.subr.mxu0 0.0
    %1444 = vmatpush2.msra.mxu0 0.0
    %1445 = vmatprep.subr.mxu0 0.0
    %1446 = vmatpush2.msra.mxu0 0.0
    %1447 = vmatprep.subr.mxu0 0.0
    %1448 = vmatpush2.msra.mxu0 0.0
    %1449 = vmatprep.subr.mxu0 0.0
    %1450 = vmatpush2.msra.mxu0 0.0
    %1451 = vmatprep.subr.mxu0 0.0
    %1452 = vmatpush2.msra.mxu0 0.0
    %1453 = vmatprep.mubr.f32.mxu0 0.0
    %1454 = vmatmul.mubr.f32.gmra.mxu0 %v1387
    %v1455 = vpop.f32.mrf.mxu0
    %v1456 = vadd.f32 0.0, %v1455
    %v1457 = vpop.f32.mrf.mxu0
    %1458 = vdwg.mxu0
    %vm1459 = vcmask 254976
    %1460 = vst.msk [vmem:[#allocation9] sm:$0x3] %vm1459, %v1456
    // Predicated region
    $region58: #{tpu_custom_call.1} parent=1 // pred_check
      _
    $region59: #{tpu_custom_call.1} parent=1 // pred_check_branch
      %1462 = sbr.rel (0) target = $region61
    $region60: #{tpu_custom_call.1} parent=1 // pred_region
      %s1464 = ssub.s32 32, 32
      %1465 = vsyncadd [#allocation5], %s1464
      %s1467 = sshll.u32 [#allocation9], 4
      %s1468 = int_to_ptr.vmem [resolvable:$true] %s1467
      %1470 = dma.vmem_to_hbm [thread:$0]  %s1468, 32, %s11, [#allocation5]
    $region61: #{tpu_custom_call.1} parent=1 // pred_fallthru
      _
    // Predicated region
    $region62: #{tpu_custom_call.1} parent=1 // pred_check
      _
    $region63: #{tpu_custom_call.1} parent=1 // pred_check_branch
      %1472 = sbr.rel (0) target = $region65
    $region64: #{tpu_custom_call.1} parent=1 // pred_region
      %1473 = dma.done [#allocation5], 32
    $region65: #{tpu_custom_call.1} parent=1 // pred_fallthru
      _
    %1474 = vsyncpa [#allocation4], 1
    %1475 = vsyncpa [#allocation7], 1
    %1476 = vsyncpa [#allocation5], 1

</llo_original>
